<compile_context>
chip_gen: v6e
topology: v6e:2x2x1
jax: 0.10.0
libtpu: 0.0.40
codegen_flags: <defaults>
</compile_context>

<pallas_src>
import functools

import jax
import jax.numpy as jnp
from jax.experimental import pallas as pl
from jax.experimental.pallas import tpu as pltpu


_HIDDEN_DIMS = [(3, 64), (64, 64), (64, 64), (64, 128)]  # + (128, emb_dims)
_MiB = 1024 * 1024


def _pointnet_kernel(x_ref, w1_ref, w2_ref, w3_ref, w4_ref, w5_ref, b_ref, o_ref,
                     *, bias_offsets, couts):
    """One (channels x point-tile) slab through all 5 conv1x1+BN+ReLU stages.

    x_ref : (8, tile_n)        bf16  input points (3 channels zero-padded to 8)
    wL_ref: (cout_L, cin_L)    bf16  conv weight with the BN scale pre-folded
    b_ref : (sum(cout_L), 1)   f32   BN shifts packed at cumulative offsets
    o_ref : (emb_dims, tile_n) out dtype (bf16 by default)
    """
    w_refs = (w1_ref, w2_ref, w3_ref, w4_ref, w5_ref)

    h = x_ref[...]                                             # bf16 (cin, tile_n)
    for l, w_ref in enumerate(w_refs):
        off, cout = bias_offsets[l], couts[l]
        # MXU: bf16 x bf16 with f32 accumulation.
        y = jnp.dot(w_ref[...], h, preferred_element_type=jnp.float32)
        # Folded-BN per-channel shift (8-aligned sublane slice, lane broadcast)
        # + ReLU, in f32 on the VPU.  Epilogue is intentionally minimal.
        y = y + b_ref[off:off + cout, 0:1]
        y = jnp.maximum(y, 0.0)
        if l + 1 < len(w_refs):
            h = y.astype(jnp.bfloat16)
        else:
            o_ref[...] = y.astype(o_ref.dtype)


def _tpu_vmem_and_cores():
    """Generation-aware scoped-VMEM limit and TensorCore count.

    v5e/v6e: 128 MiB physical VMEM, 1 TC -> ~96 MiB scoped limit.
    v7x    :  64 MiB per TC,        2 TC -> ~48 MiB scoped limit.
    Falls back to the most conservative (v7x-like) numbers if the query fails.
    """
    phys, cores = 64 * _MiB, 1
    try:
        info = pltpu.get_tpu_info()
        phys = int(getattr(info, "vmem_capacity_bytes", phys) or phys)
        cores = int(getattr(info, "num_cores", cores) or cores)
    except Exception:
        pass
    scoped = min(phys * 3 // 4, 96 * _MiB)
    return int(scoped), cores


def _default_tile_n(N, emb_dims, out_itemsize, budget_bytes, min_tiles=1):
    """Largest point tile (multiple of 128, <= 4096) whose double-buffered
    working set fits the generation-aware VMEM budget."""
    if N <= 128:
        return int(N)                       # single full-width block
    fixed = 2 * _MiB                        # double-buffered weights + shifts
    budget = max(int(budget_bytes) - fixed, 4 * _MiB)
    per_col = (2 * emb_dims * out_itemsize  # double-buffered output block
               + 3 * emb_dims * 4           # f32 epilogue / inter-layer temps
               + 2 * 8 * 2                  # double-buffered bf16 input block
               + 768)                       # slack
    t = (budget // per_col) // 128 * 128
    t = min(t, 4096, (N // 128) * 128)      # never exceed the array extent
    if min_tiles > 1 and N >= min_tiles * 128:
        t = min(t, (N // min_tiles) // 128 * 128)   # keep all TCs pipelined
    return int(max(128, t))


def pointnet_forward(x_bcn, weights, bn_params, *, tile_n=None, eps=1e-5,
                     out_dtype=jnp.bfloat16):
    """Fused PointNet forward.

    x_bcn    : (B, 3, N) float32, PyTorch NCW layout.
    weights  : 5 conv weights, layer l shaped (cout_l, cin_l)
               (PyTorch Conv1d weight (cout, cin, 1) squeezed).
    bn_params: 5 tuples (gamma, beta, running_mean, running_var).
    Returns (B, emb_dims, N) in `out_dtype` (bf16 by default; pass jnp.float32
    for PyTorch-dtype output at ~2x the HBM write traffic).
    """
    B, cin, N = x_bcn.shape
    assert cin == 3
    couts = [int(w.shape[0]) for w in weights]
    emb_dims = couts[-1]
    n_layers = len(weights)
    assert n_layers == 5
    assert emb_dims % 8 == 0
    assert all(c % 8 == 0 for c in couts)
    out_itemsize = jnp.dtype(out_dtype).itemsize

    # Fold eval-mode BatchNorm: scale goes into the weights, only the shift
    # survives as a per-channel add.
    folded_w, shifts = [], []
    for w, (gamma, beta, rmean, rvar) in zip(weights, bn_params):
        s = gamma.astype(jnp.float32) * jax.lax.rsqrt(rvar.astype(jnp.float32) + eps)
        folded_w.append((w.astype(jnp.float32) * s[:, None]).astype(jnp.bfloat16))
        shifts.append(beta.astype(jnp.float32) - rmean.astype(jnp.float32) * s)

    # Cast to bf16 AND zero-pad channels 3 -> 8 in one fused wrapper op
    # (halves input DMA); matching zero columns in W1 keep the math identical.
    cin_pad = 8
    x_p = jnp.pad(x_bcn.astype(jnp.bfloat16), ((0, 0), (0, cin_pad - cin), (0, 0)))
    folded_w[0] = jnp.pad(folded_w[0], ((0, 0), (0, cin_pad - cin)))

    # Pack the 5 shift vectors densely at cumulative (8-aligned) offsets:
    # channels on sublanes, one lane (lane-padded to 128 by layout).
    offsets, total = [], 0
    for c in couts:
        offsets.append(total)
        total += c                           # every cout is a multiple of 8
    b_packed = jnp.zeros((total, 1), jnp.float32)
    for off, shift, c in zip(offsets, shifts, couts):
        b_packed = b_packed.at[off:off + c, 0].set(shift)

    scoped_vmem, cores = _tpu_vmem_and_cores()
    if tile_n is None:
        # Only split a single point cloud across grid steps when there is more
        # than one TensorCore; then give each core >=2 steps for pipelining.
        min_tiles = 2 * cores if (B == 1 and cores > 1) else 1
        tile_n = _default_tile_n(N, emb_dims, out_itemsize,
                                 budget_bytes=scoped_vmem - 8 * _MiB,
                                 min_tiles=min_tiles)
    else:
        assert tile_n > 0 and (tile_n >= N or tile_n % 128 == 0), \
            "manual tile_n must be a multiple of 128 (or cover all of N)"
    grid = (B, pl.cdiv(N, tile_n))

    in_specs = [pl.BlockSpec((None, cin_pad, tile_n), lambda b, j: (b, 0, j))]
    operands = [x_p]
    for w in folded_w:
        in_specs.append(pl.BlockSpec(w.shape, lambda b, j: (0, 0)))
        operands.append(w)
    in_specs.append(pl.BlockSpec(b_packed.shape, lambda b, j: (0, 0)))
    operands.append(b_packed)
    # TODO(synk): pipeline_mode=pl.Buffered(1) on the constant-index
    # weight/shift specs would reclaim ~0.6 MiB more VMEM; left double-buffered
    # for portability across jax versions.

    flops = 2 * B * N * sum(int(w.shape[0]) * int(w.shape[1]) for w in weights)
    bytes_accessed = (x_p.size * 2                      # bf16 input read
                      + B * emb_dims * N * out_itemsize  # dominant output write
                      + sum(int(w.size) * 2 for w in folded_w)
                      + int(b_packed.size) * 4)

    kernel = functools.partial(_pointnet_kernel,
                               bias_offsets=tuple(offsets), couts=tuple(couts))

    return pl.pallas_call(
        kernel,
        out_shape=jax.ShapeDtypeStruct((B, emb_dims, N), out_dtype),
        grid_spec=pltpu.PrefetchScalarGridSpec(
            num_scalar_prefetch=0,
            grid=grid,
            in_specs=in_specs,
            out_specs=pl.BlockSpec((None, emb_dims, tile_n), lambda b, j: (b, 0, j)),
        ),
        compiler_params=pltpu.CompilerParams(
            dimension_semantics=("parallel", "parallel"),
            vmem_limit_bytes=int(scoped_vmem),
        ),
        cost_estimate=pl.CostEstimate(flops=int(flops), transcendentals=0,
                                      bytes_accessed=int(bytes_accessed)),
    )(*operands)


def pointnet_reference(x_bcn, weights, bn_params, *, eps=1e-5):
    """Plain-JAX reference mirroring PyTorch eval-mode forward; matmul inputs
    are rounded to bf16 exactly like the kernel (f32 accumulation)."""
    h = x_bcn.astype(jnp.float32)
    for w, (gamma, beta, rmean, rvar) in zip(weights, bn_params):
        s = gamma * jax.lax.rsqrt(rvar + eps)
        w_f = (w * s[:, None]).astype(jnp.bfloat16)
        y = jnp.einsum("oc,bcn->bon", w_f, h.astype(jnp.bfloat16),
                       preferred_element_type=jnp.float32)
        y = y + (beta - rmean * s)[None, :, None]
        h = jnp.maximum(y, 0.0)
    return h


def make_params(key, emb_dims=512):
    """Deterministic synthetic parameters with the shapes implied by __init__.

    Conv1d(cin, cout, k=1, bias=False) weight (cout, cin, 1) is stored as
    (cout, cin) so the kernel can do W @ x directly.
    """
    dims = _HIDDEN_DIMS + [(128, emb_dims)]
    keys = jax.random.split(key, 5 * len(dims))
    weights, bn_params = [], []
    ki = 0
    for cin, cout in dims:
        fan = cin ** -0.5
        w = jax.random.uniform(keys[ki], (cout, cin), jnp.float32, -fan, fan); ki += 1
        gamma = jax.random.uniform(keys[ki], (cout,), jnp.float32, 0.5, 1.5); ki += 1
        beta = jax.random.normal(keys[ki], (cout,), jnp.float32) * 0.1; ki += 1
        rmean = jax.random.normal(keys[ki], (cout,), jnp.float32) * 0.1; ki += 1
        rvar = jax.random.uniform(keys[ki], (cout,), jnp.float32, 0.5, 1.5); ki += 1
        weights.append(w)
        bn_params.append((gamma, beta, rmean, rvar))
    return weights, bn_params


if __name__ == "__main__":
    key = jax.random.PRNGKey(0)
    k_x, k_p = jax.random.split(key)

    B, N = 2, 256          # small demo: 2 point clouds, 256 points each
    emb_dims = 256         # reduced from the default 512 to keep the demo small

    x = jax.random.normal(k_x, (B, 3, N), jnp.float32)
    weights, bn_params = make_params(k_p, emb_dims=emb_dims)

    # Default (bf16-output) path: the benchmarked configuration.
    out = jax.block_until_ready(pointnet_forward(x, weights, bn_params))
    ref = pointnet_reference(x, weights, bn_params)
    assert out.shape == (B, emb_dims, N) and out.dtype == jnp.bfloat16
    assert jnp.allclose(out.astype(jnp.float32), ref, atol=2e-2, rtol=2e-2), \
        "bf16-output mismatch vs reference"

    # Ragged N (not a multiple of 128) + f32 output: exercises the masked
    # boundary-block writeback and the PyTorch-dtype path.
    N2 = 200
    x2 = jax.random.normal(k_x, (B, 3, N2), jnp.float32)
    out2 = jax.block_until_ready(
        pointnet_forward(x2, weights, bn_params, out_dtype=jnp.float32))
    ref2 = pointnet_reference(x2, weights, bn_params)
    assert out2.shape == (B, emb_dims, N2)
    assert bool(jnp.all(jnp.isfinite(out2))), "NaN/Inf leaked from padded tail"
    assert jnp.allclose(out2, ref2, atol=1e-2, rtol=1e-2), \
        "ragged-N mismatch vs reference"

    print("KERNEL_OK")
</pallas_src>

<mosaic_0001>
module attributes {stable_mosaic.version = 11 : i64} {
  func.func @_pointnet_kernel(%arg0: i32, %arg1: i32, %arg2: memref<1x8x256xbf16, #tpu.memory_space<vmem>>, %arg3: memref<64x8xbf16, #tpu.memory_space<vmem>>, %arg4: memref<64x64xbf16, #tpu.memory_space<vmem>>, %arg5: memref<64x64xbf16, #tpu.memory_space<vmem>>, %arg6: memref<128x64xbf16, #tpu.memory_space<vmem>>, %arg7: memref<256x128xbf16, #tpu.memory_space<vmem>>, %arg8: memref<576x1xf32, #tpu.memory_space<vmem>>, %arg9: memref<1x256x256xbf16, #tpu.memory_space<vmem>>) attributes {dimension_semantics = [#tpu.dimension_semantics<parallel>, #tpu.dimension_semantics<parallel>], iteration_bounds = array<i64: 2, 1>, scalar_prefetch = 0 : i64, scratch_operands = 0 : i64, tpu.core_type = #tpu.core_type<tc>, window_params = [{transform_indices = @transform_0, window_bounds = array<i64: 1, 8, 256>}, {pipeline_mode = #tpu.pipeline_mode<synchronous>, transform_indices = @transform_1, window_bounds = array<i64: 64, 8>}, {pipeline_mode = #tpu.pipeline_mode<synchronous>, transform_indices = @transform_2, window_bounds = array<i64: 64, 64>}, {pipeline_mode = #tpu.pipeline_mode<synchronous>, transform_indices = @transform_3, window_bounds = array<i64: 64, 64>}, {pipeline_mode = #tpu.pipeline_mode<synchronous>, transform_indices = @transform_4, window_bounds = array<i64: 128, 64>}, {pipeline_mode = #tpu.pipeline_mode<synchronous>, transform_indices = @transform_5, window_bounds = array<i64: 256, 128>}, {pipeline_mode = #tpu.pipeline_mode<synchronous>, transform_indices = @transform_6, window_bounds = array<i64: 576, 1>}, {transform_indices = @transform_7, window_bounds = array<i64: 1, 256, 256>}]} {
    %c0 = arith.constant 0 : index
    %c0_0 = arith.constant 0 : index
    %c0_1 = arith.constant 0 : index
    %0 = vector.load %arg2[%c0, %c0_0, %c0_1] : memref<1x8x256xbf16, #tpu.memory_space<vmem>>, vector<1x8x256xbf16>
    %1 = vector.shape_cast %0 : vector<1x8x256xbf16> to vector<8x256xbf16>
    %c0_2 = arith.constant 0 : index
    %c0_3 = arith.constant 0 : index
    %2 = vector.load %arg3[%c0_2, %c0_3] : memref<64x8xbf16, #tpu.memory_space<vmem>>, vector<64x8xbf16>
    %cst = arith.constant dense<0.000000e+00> : vector<64x256xf32>
    %3 = tpu.matmul %2, %1, %cst {dimension_numbers = #tpu.dot_dimension_numbers<[1], [0], [0], [1], [0, 0, 1, 1], [], []>} : vector<64x8xbf16>, vector<8x256xbf16>, vector<64x256xf32> -> vector<64x256xf32>
    %c0_4 = arith.constant 0 : index
    %c0_5 = arith.constant 0 : index
    %4 = vector.load %arg8[%c0_4, %c0_5] : memref<576x1xf32, #tpu.memory_space<vmem>>, vector<64x1xf32>
    %5 = vector.broadcast %4 : vector<64x1xf32> to vector<64x256xf32>
    %6 = arith.addf %3, %5 : vector<64x256xf32>
    %cst_6 = arith.constant 0.000000e+00 : f32
    %7 = vector.broadcast %cst_6 : f32 to vector<64x256xf32>
    %8 = arith.maximumf %6, %7 : vector<64x256xf32>
    %9 = arith.truncf %8 : vector<64x256xf32> to vector<64x256xbf16>
    %c0_7 = arith.constant 0 : index
    %c0_8 = arith.constant 0 : index
    %10 = vector.load %arg4[%c0_7, %c0_8] : memref<64x64xbf16, #tpu.memory_space<vmem>>, vector<64x64xbf16>
    %cst_9 = arith.constant dense<0.000000e+00> : vector<64x256xf32>
    %11 = tpu.matmul %10, %9, %cst_9 {dimension_numbers = #tpu.dot_dimension_numbers<[1], [0], [0], [1], [0, 0, 1, 1], [], []>} : vector<64x64xbf16>, vector<64x256xbf16>, vector<64x256xf32> -> vector<64x256xf32>
    %c64 = arith.constant 64 : index
    %c0_10 = arith.constant 0 : index
    %12 = vector.load %arg8[%c64, %c0_10] : memref<576x1xf32, #tpu.memory_space<vmem>>, vector<64x1xf32>
    %13 = vector.broadcast %12 : vector<64x1xf32> to vector<64x256xf32>
    %14 = arith.addf %11, %13 : vector<64x256xf32>
    %cst_11 = arith.constant 0.000000e+00 : f32
    %15 = vector.broadcast %cst_11 : f32 to vector<64x256xf32>
    %16 = arith.maximumf %14, %15 : vector<64x256xf32>
    %17 = arith.truncf %16 : vector<64x256xf32> to vector<64x256xbf16>
    %c0_12 = arith.constant 0 : index
    %c0_13 = arith.constant 0 : index
    %18 = vector.load %arg5[%c0_12, %c0_13] : memref<64x64xbf16, #tpu.memory_space<vmem>>, vector<64x64xbf16>
    %cst_14 = arith.constant dense<0.000000e+00> : vector<64x256xf32>
    %19 = tpu.matmul %18, %17, %cst_14 {dimension_numbers = #tpu.dot_dimension_numbers<[1], [0], [0], [1], [0, 0, 1, 1], [], []>} : vector<64x64xbf16>, vector<64x256xbf16>, vector<64x256xf32> -> vector<64x256xf32>
    %c128 = arith.constant 128 : index
    %c0_15 = arith.constant 0 : index
    %20 = vector.load %arg8[%c128, %c0_15] : memref<576x1xf32, #tpu.memory_space<vmem>>, vector<64x1xf32>
    %21 = vector.broadcast %20 : vector<64x1xf32> to vector<64x256xf32>
    %22 = arith.addf %19, %21 : vector<64x256xf32>
    %cst_16 = arith.constant 0.000000e+00 : f32
    %23 = vector.broadcast %cst_16 : f32 to vector<64x256xf32>
    %24 = arith.maximumf %22, %23 : vector<64x256xf32>
    %25 = arith.truncf %24 : vector<64x256xf32> to vector<64x256xbf16>
    %c0_17 = arith.constant 0 : index
    %c0_18 = arith.constant 0 : index
    %26 = vector.load %arg6[%c0_17, %c0_18] : memref<128x64xbf16, #tpu.memory_space<vmem>>, vector<128x64xbf16>
    %cst_19 = arith.constant dense<0.000000e+00> : vector<128x256xf32>
    %27 = tpu.matmul %26, %25, %cst_19 {dimension_numbers = #tpu.dot_dimension_numbers<[1], [0], [0], [1], [0, 0, 1, 1], [], []>} : vector<128x64xbf16>, vector<64x256xbf16>, vector<128x256xf32> -> vector<128x256xf32>
    %c192 = arith.constant 192 : index
    %c0_20 = arith.constant 0 : index
    %28 = vector.load %arg8[%c192, %c0_20] : memref<576x1xf32, #tpu.memory_space<vmem>>, vector<128x1xf32>
    %29 = vector.broadcast %28 : vector<128x1xf32> to vector<128x256xf32>
    %30 = arith.addf %27, %29 : vector<128x256xf32>
    %cst_21 = arith.constant 0.000000e+00 : f32
    %31 = vector.broadcast %cst_21 : f32 to vector<128x256xf32>
    %32 = arith.maximumf %30, %31 : vector<128x256xf32>
    %33 = arith.truncf %32 : vector<128x256xf32> to vector<128x256xbf16>
    %c0_22 = arith.constant 0 : index
    %c0_23 = arith.constant 0 : index
    %34 = vector.load %arg7[%c0_22, %c0_23] : memref<256x128xbf16, #tpu.memory_space<vmem>>, vector<256x128xbf16>
    %cst_24 = arith.constant dense<0.000000e+00> : vector<256x256xf32>
    %35 = tpu.matmul %34, %33, %cst_24 {dimension_numbers = #tpu.dot_dimension_numbers<[1], [0], [0], [1], [0, 0, 1, 1], [], []>} : vector<256x128xbf16>, vector<128x256xbf16>, vector<256x256xf32> -> vector<256x256xf32>
    %c320 = arith.constant 320 : index
    %c0_25 = arith.constant 0 : index
    %36 = vector.load %arg8[%c320, %c0_25] : memref<576x1xf32, #tpu.memory_space<vmem>>, vector<256x1xf32>
    %37 = vector.broadcast %36 : vector<256x1xf32> to vector<256x256xf32>
    %38 = arith.addf %35, %37 : vector<256x256xf32>
    %cst_26 = arith.constant 0.000000e+00 : f32
    %39 = vector.broadcast %cst_26 : f32 to vector<256x256xf32>
    %40 = arith.maximumf %38, %39 : vector<256x256xf32>
    %41 = arith.truncf %40 : vector<256x256xf32> to vector<256x256xbf16>
    %c0_27 = arith.constant 0 : index
    %c0_28 = arith.constant 0 : index
    %c0_29 = arith.constant 0 : index
    %42 = vector.load %arg9[%c0_27, %c0_28, %c0_29] : memref<1x256x256xbf16, #tpu.memory_space<vmem>>, vector<1x256x256xbf16>
    %43 = vector.shape_cast %42 : vector<1x256x256xbf16> to vector<256x256xbf16>
    %44 = vector.shape_cast %41 : vector<256x256xbf16> to vector<1x256x256xbf16>
    tpu.vector_store %arg9[%c0_27, %c0_28, %c0_29], %44 {strides = array<i32>} : memref<1x256x256xbf16, #tpu.memory_space<vmem>>, vector<1x256x256xbf16>,
    return
  }
  func.func @transform_0(%arg0: i32, %arg1: i32) -> (i32, i32, i32) {
    %c0_i32 = arith.constant 0 : i32
    %c0_i32_0 = arith.constant 0 : i32
    return %arg0, %c0_i32, %arg1 : i32, i32, i32
  }
  func.func @transform_1(%arg0: i32, %arg1: i32) -> (i32, i32) {
    %c0_i32 = arith.constant 0 : i32
    %c0_i32_0 = arith.constant 0 : i32
    %c0_i32_1 = arith.constant 0 : i32
    return %c0_i32, %c0_i32_0 : i32, i32
  }
  func.func @transform_2(%arg0: i32, %arg1: i32) -> (i32, i32) {
    %c0_i32 = arith.constant 0 : i32
    %c0_i32_0 = arith.constant 0 : i32
    %c0_i32_1 = arith.constant 0 : i32
    return %c0_i32, %c0_i32_0 : i32, i32
  }
  func.func @transform_3(%arg0: i32, %arg1: i32) -> (i32, i32) {
    %c0_i32 = arith.constant 0 : i32
    %c0_i32_0 = arith.constant 0 : i32
    %c0_i32_1 = arith.constant 0 : i32
    return %c0_i32, %c0_i32_0 : i32, i32
  }
  func.func @transform_4(%arg0: i32, %arg1: i32) -> (i32, i32) {
    %c0_i32 = arith.constant 0 : i32
    %c0_i32_0 = arith.constant 0 : i32
    %c0_i32_1 = arith.constant 0 : i32
    return %c0_i32, %c0_i32_0 : i32, i32
  }
  func.func @transform_5(%arg0: i32, %arg1: i32) -> (i32, i32) {
    %c0_i32 = arith.constant 0 : i32
    %c0_i32_0 = arith.constant 0 : i32
    %c0_i32_1 = arith.constant 0 : i32
    return %c0_i32, %c0_i32_0 : i32, i32
  }
  func.func @transform_6(%arg0: i32, %arg1: i32) -> (i32, i32) {
    %c0_i32 = arith.constant 0 : i32
    %c0_i32_0 = arith.constant 0 : i32
    %c0_i32_1 = arith.constant 0 : i32
    return %c0_i32, %c0_i32_0 : i32, i32
  }
  func.func @transform_7(%arg0: i32, %arg1: i32) -> (i32, i32, i32) {
    %c0_i32 = arith.constant 0 : i32
    %c0_i32_0 = arith.constant 0 : i32
    return %arg0, %c0_i32, %arg1 : i32, i32, i32
  }
}

</mosaic_0001>

<llo_original>
// kernel: tpu_custom_call.1
$region0: #{tpu_custom_call.1}
  #allocation0 [shape = 'u32[]', space=smem, size = 0x4, offset = 0x4, fixed_abs, tag = 'smem constant byte address 0x4 - core index']
  #allocation1 [shape = 'u32[144,128]{1,0:T(1,128)}', space=vmem, size = 0x12000, scoped, tag = 'internal scratch']
  %s0 = inlined_call_operand.vmem [shape: bf16[2,8,256], index: 0, kind: input, shape index: {}]
  %s1 = inlined_call_operand.vmem [shape: bf16[64,8], index: 1, kind: input, shape index: {}]
  %s2 = inlined_call_operand.vmem [shape: bf16[64,64], index: 2, kind: input, shape index: {}]
  %s3 = inlined_call_operand.vmem [shape: bf16[64,64], index: 3, kind: input, shape index: {}]
  %s4 = inlined_call_operand.vmem [shape: bf16[128,64], index: 4, kind: input, shape index: {}]
  %s5 = inlined_call_operand.vmem [shape: bf16[256,128], index: 5, kind: input, shape index: {}]
  %s6 = inlined_call_operand.vmem [shape: f32[576,1], index: 6, kind: input, shape index: {}]
  %s7 = inlined_call_operand.hbm [shape: bf16[2,256,256], index: 7, kind: output, shape index: {}]
  %s8 = sld [smem:[#allocation0]]
  $region61: #{tpu_custom_call.1} parent=0
    _
  %s10 = ssub.s32 1, %s8
  %s11 = scalar_select 0, %s10, %s8
  $region1: #{tpu_custom_call.1} parent=0
    #allocation2 [shape = 'u8[262144]{0}', space=vmem, size = 0x40000, scoped, tag = 'output window, operand 0']
    #allocation3 [shape = 's32[2]{0}', space=sflag, size = 0x8, scoped, tag = 'scoped memory for tpu_custom_call.1']
    %12 = vsyncpa [#allocation3], 0
    %s13 = scalar_lea.sflag [#allocation3], 1
    %14 = vsyncpa %s13, 0
    loop: start=0, step=1, limit=4
    $region2: #{tpu_custom_call.1} parent=1 // loop_pre_header
      _
    $region3: #{tpu_custom_call.1} parent=1 // loop_header
      %s16 = sphi 0, %s20
      %p17 = scmp.ge.s32.totalorder %s16, 4
      %s23 = sphi 0, %s35
      %s24 = sphi 0, %s31
      %s25 = sphi 0, %s23
      %s26 = sphi 0, %s24
      %s27 = sphi 0, %s25
      %s28 = sphi 0, %s26
      %s40 = sphi 0, %s42
      %s43 = sphi 0, %s40
      %s44 = sphi 0, %s43
      %s60 = sphi 0, %s44
      %s64 = sphi 0, %s64
      %s66 = sphi 0, %s64
      %s67 = sphi 0, %s66
      %s81 = sphi 0, %s67
      %s85 = sphi 0, %s85
      %s87 = sphi 0, %s85
      %s88 = sphi 0, %s87
      %s102 = sphi 0, %s88
      %s106 = sphi 0, %s106
      %s108 = sphi 0, %s106
      %s109 = sphi 0, %s108
      %s123 = sphi 0, %s109
      %s127 = sphi 0, %s127
      %s129 = sphi 0, %s127
      %s130 = sphi 0, %s129
      %s144 = sphi 0, %s130
      %s148 = sphi 0, %s148
      %s150 = sphi 0, %s148
      %s151 = sphi 0, %s150
      %s165 = sphi 0, %s151
      %s169 = sphi 0, %s169
      %s171 = sphi 0, %s169
      %s172 = sphi 0, %s171
      %s186 = sphi 0, %s172
      %s194 = sphi 0, %s196
      %s197 = sphi 0, %s194
      %s198 = sphi 0, %s197
      %s214 = sphi 0, %s198
    $region4: #{tpu_custom_call.1} parent=1 // loop_header_branch
      %19 = sbr.rel (%p17) target = $region8
    $region5: #{tpu_custom_call.1} parent=1 // loop_body
      %s21 = ssub.s32 %s16, 1
      %s22 = ssub.s32 %s16, 2
      %s29 = sadd.s32 1, %s24
      %p30 = scmp.ge.s32.totalorder %s29, 1
      %s31 = scalar_select %p30, 0, %s29
      %s32 = sadd.s32 1, %s23
      %s33 = scalar_select %p30, %s32, %s23
      %p34 = scmp.ge.s32.totalorder %s33, 2
      %s35 = scalar_select %p34, 0, %s33
      %s36 = ssub.s32 %s23, %s35
      %s37 = ssub.s32 %s24, %s31
      %s38 = sor.u32 %s36, %s37
      %p39 = scmp.eq.s32.totalorder %s38, 0
      %s41 = sadd.s32 %s40, 1
      %s42 = scalar_select %p39, %s40, %s41
      %p45 = pneg %p39
      %p46 = scmp.eq.s32.totalorder %s16, 1
      %p47 = por %p45, %p46
      %p48 = scmp.ne.s32.totalorder %s40, %s43
      %p49 = scmp.eq.s32.totalorder %s16, 0
      %p50 = por %p48, %p49
      %p51 = scmp.ne.s32.totalorder %s40, %s43
      %p52 = scmp.eq.s32.totalorder %s21, 1
      %p53 = por %p51, %p52
      %p54 = scmp.ne.s32.totalorder %s43, %s44
      %p55 = scmp.eq.s32.totalorder %s21, 0
      %p56 = por %p54, %p55
      %p57 = scmp.ne.s32.totalorder %s43, %s44
      %p58 = scmp.eq.s32.totalorder %s22, 1
      %p59 = por %p57, %p58
      %p61 = scmp.ne.s32.totalorder %s44, %s60
      %p62 = scmp.eq.s32.totalorder %s22, 0
      %p63 = por %p61, %p62
      %s65 = sadd.s32 %s64, 1
      %p68 = scmp.eq.s32.totalorder %s16, 1
      %p69 = scmp.ne.s32.totalorder %s64, %s66
      %p70 = scmp.eq.s32.totalorder %s16, 0
      %p71 = por %p69, %p70
      %p72 = scmp.ne.s32.totalorder %s64, %s66
      %p73 = scmp.eq.s32.totalorder %s21, 1
      %p74 = por %p72, %p73
      %p75 = scmp.ne.s32.totalorder %s66, %s67
      %p76 = scmp.eq.s32.totalorder %s21, 0
      %p77 = por %p75, %p76
      %p78 = scmp.ne.s32.totalorder %s66, %s67
      %p79 = scmp.eq.s32.totalorder %s22, 1
      %p80 = por %p78, %p79
      %p82 = scmp.ne.s32.totalorder %s67, %s81
      %p83 = scmp.eq.s32.totalorder %s22, 0
      %p84 = por %p82, %p83
      %s86 = sadd.s32 %s85, 1
      %p89 = scmp.eq.s32.totalorder %s16, 1
      %p90 = scmp.ne.s32.totalorder %s85, %s87
      %p91 = scmp.eq.s32.totalorder %s16, 0
      %p92 = por %p90, %p91
      %p93 = scmp.ne.s32.totalorder %s85, %s87
      %p94 = scmp.eq.s32.totalorder %s21, 1
      %p95 = por %p93, %p94
      %p96 = scmp.ne.s32.totalorder %s87, %s88
      %p97 = scmp.eq.s32.totalorder %s21, 0
      %p98 = por %p96, %p97
      %p99 = scmp.ne.s32.totalorder %s87, %s88
      %p100 = scmp.eq.s32.totalorder %s22, 1
      %p101 = por %p99, %p100
      %p103 = scmp.ne.s32.totalorder %s88, %s102
      %p104 = scmp.eq.s32.totalorder %s22, 0
      %p105 = por %p103, %p104
      %s107 = sadd.s32 %s106, 1
      %p110 = scmp.eq.s32.totalorder %s16, 1
      %p111 = scmp.ne.s32.totalorder %s106, %s108
      %p112 = scmp.eq.s32.totalorder %s16, 0
      %p113 = por %p111, %p112
      %p114 = scmp.ne.s32.totalorder %s106, %s108
      %p115 = scmp.eq.s32.totalorder %s21, 1
      %p116 = por %p114, %p115
      %p117 = scmp.ne.s32.totalorder %s108, %s109
      %p118 = scmp.eq.s32.totalorder %s21, 0
      %p119 = por %p117, %p118
      %p120 = scmp.ne.s32.totalorder %s108, %s109
      %p121 = scmp.eq.s32.totalorder %s22, 1
      %p122 = por %p120, %p121
      %p124 = scmp.ne.s32.totalorder %s109, %s123
      %p125 = scmp.eq.s32.totalorder %s22, 0
      %p126 = por %p124, %p125
      %s128 = sadd.s32 %s127, 1
      %p131 = scmp.eq.s32.totalorder %s16, 1
      %p132 = scmp.ne.s32.totalorder %s127, %s129
      %p133 = scmp.eq.s32.totalorder %s16, 0
      %p134 = por %p132, %p133
      %p135 = scmp.ne.s32.totalorder %s127, %s129
      %p136 = scmp.eq.s32.totalorder %s21, 1
      %p137 = por %p135, %p136
      %p138 = scmp.ne.s32.totalorder %s129, %s130
      %p139 = scmp.eq.s32.totalorder %s21, 0
      %p140 = por %p138, %p139
      %p141 = scmp.ne.s32.totalorder %s129, %s130
      %p142 = scmp.eq.s32.totalorder %s22, 1
      %p143 = por %p141, %p142
      %p145 = scmp.ne.s32.totalorder %s130, %s144
      %p146 = scmp.eq.s32.totalorder %s22, 0
      %p147 = por %p145, %p146
      %s149 = sadd.s32 %s148, 1
      %p152 = scmp.eq.s32.totalorder %s16, 1
      %p153 = scmp.ne.s32.totalorder %s148, %s150
      %p154 = scmp.eq.s32.totalorder %s16, 0
      %p155 = por %p153, %p154
      %p156 = scmp.ne.s32.totalorder %s148, %s150
      %p157 = scmp.eq.s32.totalorder %s21, 1
      %p158 = por %p156, %p157
      %p159 = scmp.ne.s32.totalorder %s150, %s151
      %p160 = scmp.eq.s32.totalorder %s21, 0
      %p161 = por %p159, %p160
      %p162 = scmp.ne.s32.totalorder %s150, %s151
      %p163 = scmp.eq.s32.totalorder %s22, 1
      %p164 = por %p162, %p163
      %p166 = scmp.ne.s32.totalorder %s151, %s165
      %p167 = scmp.eq.s32.totalorder %s22, 0
      %p168 = por %p166, %p167
      %s170 = sadd.s32 %s169, 1
      %p173 = scmp.eq.s32.totalorder %s16, 1
      %p174 = scmp.ne.s32.totalorder %s169, %s171
      %p175 = scmp.eq.s32.totalorder %s16, 0
      %p176 = por %p174, %p175
      %p177 = scmp.ne.s32.totalorder %s169, %s171
      %p178 = scmp.eq.s32.totalorder %s21, 1
      %p179 = por %p177, %p178
      %p180 = scmp.ne.s32.totalorder %s171, %s172
      %p181 = scmp.eq.s32.totalorder %s21, 0
      %p182 = por %p180, %p181
      %p183 = scmp.ne.s32.totalorder %s171, %s172
      %p184 = scmp.eq.s32.totalorder %s22, 1
      %p185 = por %p183, %p184
      %p187 = scmp.ne.s32.totalorder %s172, %s186
      %p188 = scmp.eq.s32.totalorder %s22, 0
      %p189 = por %p187, %p188
      %s190 = ssub.s32 %s23, %s35
      %s191 = ssub.s32 %s24, %s31
      %s192 = sor.u32 %s190, %s191
      %p193 = scmp.eq.s32.totalorder %s192, 0
      %s195 = sadd.s32 %s194, 1
      %s196 = scalar_select %p193, %s194, %s195
      %p199 = pneg %p193
      %p200 = scmp.eq.s32.totalorder %s16, 1
      %p201 = por %p199, %p200
      %p202 = scmp.ne.s32.totalorder %s194, %s197
      %p203 = scmp.eq.s32.totalorder %s16, 0
      %p204 = por %p202, %p203
      %p205 = scmp.ne.s32.totalorder %s194, %s197
      %p206 = scmp.eq.s32.totalorder %s21, 1
      %p207 = por %p205, %p206
      %p208 = scmp.ne.s32.totalorder %s197, %s198
      %p209 = scmp.eq.s32.totalorder %s21, 0
      %p210 = por %p208, %p209
      %p211 = scmp.ne.s32.totalorder %s197, %s198
      %p212 = scmp.eq.s32.totalorder %s22, 1
      %p213 = por %p211, %p212
      %p215 = scmp.ne.s32.totalorder %s198, %s214
      %p216 = scmp.eq.s32.totalorder %s22, 0
      %p217 = por %p215, %p216
      %p218 = scmp.le.s32.totalorder 1, %s16
      %p219 = scmp.lt.s32.totalorder %s16, 3
      %p220 = pnand %p218, %p219
      %p221 = pneg %p220
      // Predicated region
      $region9: #{tpu_custom_call.1} parent=5 // pred_check
        _
      $region10: #{tpu_custom_call.1} parent=5 // pred_check_branch
        %223 = sbr.rel (%p220) target = $region12
      $region11: #{tpu_custom_call.1} parent=5 // pred_region
        %s224 = ssub.s32 %s16, 1
        // Predicated region
        $region13: #{tpu_custom_call.1} parent=11 // pred_check
          %p225 = pneg %p77
        $region14: #{tpu_custom_call.1} parent=11 // pred_check_branch
          %227 = sbr.rel (%p225) target = $region16
        $region15: #{tpu_custom_call.1} parent=11 // pred_region
          _
        $region16: #{tpu_custom_call.1} parent=11 // pred_fallthru
          _
        // Predicated region
        $region17: #{tpu_custom_call.1} parent=11 // pred_check
          %p228 = pneg %p98
        $region18: #{tpu_custom_call.1} parent=11 // pred_check_branch
          %230 = sbr.rel (%p228) target = $region20
        $region19: #{tpu_custom_call.1} parent=11 // pred_region
          _
        $region20: #{tpu_custom_call.1} parent=11 // pred_fallthru
          _
        // Predicated region
        $region21: #{tpu_custom_call.1} parent=11 // pred_check
          %p231 = pneg %p119
        $region22: #{tpu_custom_call.1} parent=11 // pred_check_branch
          %233 = sbr.rel (%p231) target = $region24
        $region23: #{tpu_custom_call.1} parent=11 // pred_region
          _
        $region24: #{tpu_custom_call.1} parent=11 // pred_fallthru
          _
        // Predicated region
        $region25: #{tpu_custom_call.1} parent=11 // pred_check
          %p234 = pneg %p140
        $region26: #{tpu_custom_call.1} parent=11 // pred_check_branch
          %236 = sbr.rel (%p234) target = $region28
        $region27: #{tpu_custom_call.1} parent=11 // pred_region
          _
        $region28: #{tpu_custom_call.1} parent=11 // pred_fallthru
          _
        // Predicated region
        $region29: #{tpu_custom_call.1} parent=11 // pred_check
          %p237 = pneg %p161
        $region30: #{tpu_custom_call.1} parent=11 // pred_check_branch
          %239 = sbr.rel (%p237) target = $region32
        $region31: #{tpu_custom_call.1} parent=11 // pred_region
          _
        $region32: #{tpu_custom_call.1} parent=11 // pred_fallthru
          _
        // Predicated region
        $region33: #{tpu_custom_call.1} parent=11 // pred_check
          %p240 = pneg %p182
        $region34: #{tpu_custom_call.1} parent=11 // pred_check_branch
          %242 = sbr.rel (%p240) target = $region36
        $region35: #{tpu_custom_call.1} parent=11 // pred_region
          _
        $region36: #{tpu_custom_call.1} parent=11 // pred_fallthru
          _
      $region12: #{tpu_custom_call.1} parent=5 // pred_fallthru
        _
      %p243 = scmp.lt.s32.totalorder %s16, 2
      // Predicated region
      $region37: #{tpu_custom_call.1} parent=5 // pred_check
        %p244 = pneg %p243
      $region38: #{tpu_custom_call.1} parent=5 // pred_check_branch
        %246 = sbr.rel (%p244) target = $region40
      $region39: #{tpu_custom_call.1} parent=5 // pred_region
        // Predicated region
        $region41: #{tpu_custom_call.1} parent=39 // pred_check
          %p247 = pneg %p50
        $region42: #{tpu_custom_call.1} parent=39 // pred_check_branch
          %249 = sbr.rel (%p247) target = $region44
        $region43: #{tpu_custom_call.1} parent=39 // pred_region
          %s250 = smul.u32 2, %s24
          %p251 = scmp.lt.s32.totalorder %s23, 1
          %s252 = scalar_select %p251, %s23, 1
          %p253 = scmp.lt.s32.totalorder %s250, 1
          %s254 = scalar_select %p253, %s250, 1
          %s255 = smul.addr %s252, 2
          %s256 = sadd.s32 %s254, %s255
          %s257 = smul.addr %s256, 4
          %s258 = scalar_lea.vmem %s0, %s257
          %s259 = smul.u32 2, %s24
        $region44: #{tpu_custom_call.1} parent=39 // pred_fallthru
          _
      $region40: #{tpu_custom_call.1} parent=5 // pred_fallthru
        _
      %p260 = scmp.le.s32.totalorder 1, %s16
      %p261 = scmp.lt.s32.totalorder %s16, 3
      %p262 = pnand %p260, %p261
      %p263 = pneg %p262
      // Predicated region
      $region45: #{tpu_custom_call.1} parent=5 // pred_check
        _
      $region46: #{tpu_custom_call.1} parent=5 // pred_check_branch
        %265 = sbr.rel (%p262) target = $region48
      $region47: #{tpu_custom_call.1} parent=5 // pred_region
        %s266 = ssub.s32 %s16, 1
        %s267 = smul.u32 2, %s26
        %p268 = scmp.lt.s32.totalorder %s25, 1
        %s269 = scalar_select %p268, %s25, 1
        %p270 = scmp.lt.s32.totalorder %s267, 1
        %s271 = scalar_select %p270, %s267, 1
        %s272 = smul.addr %s269, 2
        %s273 = sadd.s32 %s271, %s272
        %s274 = smul.addr %s273, 4
        %s275 = scalar_lea.vmem %s0, %s274
        %p276 = pneg %p56
        %p277 = pneg %p53
        %p278 = pneg %p77
        %p279 = pneg %p74
        %p280 = pneg %p98
        %p281 = pneg %p95
        %p282 = pneg %p119
        %p283 = pneg %p116
        %p284 = pneg %p140
        %p285 = pneg %p137
        %p286 = pneg %p161
        %p287 = pneg %p158
        %p288 = pneg %p182
        %p289 = pneg %p179
        %p290 = pneg %p210
        %p291 = pneg %p207
        %s292 = sand.u32 %s197, 1
        %s293 = scalar_lea.sflag [#allocation3], %s292
        %s294 = sand.u32 %s197, 1
        %s295 = smul.addr %s294, 256
        %s296 = scalar_lea.vmem [#allocation2], %s295
        %s297 = smul.u32 2, %s26
        %p298 = scmp.lt.s32.totalorder %s25, 1
        %s299 = scalar_select %p298, %s25, 1
        %p300 = scmp.lt.s32.totalorder %s297, 1
        %s301 = scalar_select %p300, %s297, 1
        %s302 = smul.addr %s299, 2
        %s303 = sadd.s32 %s301, %s302
        %s304 = smul.addr %s303, 4
        %s305 = scalar_lea.vmem %s0, %s304
        %s306 = smul.u32 2, %s26
        %s307 = smul.u32 2, %s26
        %v309 = vld [vmem:[%s305] sm:$0xff]
        %v310 = vld [vmem:[%s1] sm:$0xf]
        %v311 = vld [vmem:[%s1 + $0x4] sm:$0xf]
        %v312 = vld [vmem:[%s1 + $0x8] sm:$0xf]
        %v313 = vld [vmem:[%s1 + $0xc] sm:$0xf]
        %v314 = vld [vmem:[%s1 + $0x10] sm:$0xf]
        %v315 = vld [vmem:[%s1 + $0x14] sm:$0xf]
        %v316 = vld [vmem:[%s1 + $0x18] sm:$0xf]
        %v317 = vld [vmem:[%s1 + $0x1c] sm:$0xf]
        %v318 = vld [vmem:[%s6] sm:$0xff]
        %v319 = vld [vmem:[%s6 + $0x8] sm:$0xff]
        %v320 = vld [vmem:[%s6 + $0x10] sm:$0xff]
        %v321 = vld [vmem:[%s6 + $0x18] sm:$0xff]
        %v322 = vld [vmem:[%s6 + $0x20] sm:$0xff]
        %v323 = vld [vmem:[%s6 + $0x28] sm:$0xff]
        %v324 = vld [vmem:[%s6 + $0x30] sm:$0xff]
        %v325 = vld [vmem:[%s6 + $0x38] sm:$0xff]
        %327 = vset.pattern.permute.xlu0 0
        %328 = vperm.xlu0 %327, %v318
        %v329 = vpop.permute.xlu0 %328
        %332 = vset.pattern.permute.xlu0 0
        %333 = vperm.xlu0 %332, %v319
        %v334 = vpop.permute.xlu0 %333
        %337 = vset.pattern.permute.xlu0 0
        %338 = vperm.xlu0 %337, %v320
        %v339 = vpop.permute.xlu0 %338
        %342 = vset.pattern.permute.xlu0 0
        %343 = vperm.xlu0 %342, %v321
        %v344 = vpop.permute.xlu0 %343
        %347 = vset.pattern.permute.xlu0 0
        %348 = vperm.xlu0 %347, %v322
        %v349 = vpop.permute.xlu0 %348
        %352 = vset.pattern.permute.xlu0 0
        %353 = vperm.xlu0 %352, %v323
        %v354 = vpop.permute.xlu0 %353
        %357 = vset.pattern.permute.xlu0 0
        %358 = vperm.xlu0 %357, %v324
        %v359 = vpop.permute.xlu0 %358
        %362 = vset.pattern.permute.xlu0 0
        %363 = vperm.xlu0 %362, %v325
        %v364 = vpop.permute.xlu0 %363
        %v374 = vunpack.c.l.b16 %v310
        %v375 = vunpack.c.l.b16 %v311
        %v376 = vunpack.c.l.b16 %v312
        %v377 = vunpack.c.l.b16 %v313
        %v378 = vunpack.c.l.b16 %v314
        %v379 = vunpack.c.l.b16 %v315
        %v380 = vunpack.c.l.b16 %v316
        %v381 = vunpack.c.l.b16 %v317
        %v382 = vpack.c.b16 %v375, %v374
        %v383 = vpack.c.b16 %v377, %v376
        %v384 = vpack.c.b16 %v379, %v378
        %v385 = vpack.c.b16 %v381, %v380
        %v387 = vunpack.c.l.b16 %v309
        %v388 = vunpack.c.h.b16 %v309
        %v389 = vpack.c.b16 %v387, %v387
        %v390 = vpack.c.b16 %v388, %v388
        %vm391 = vcmask 64512
        %v393 = vsel %vm391, %v382, 0
        %v396 = vsel %vm391, %v383, 0
        %v399 = vsel %vm391, %v384, 0
        %v402 = vsel %vm391, %v385, 0
        %vm404 = vcmask 1043456
        %v406 = vsel %vm404, %v389, 0
        %v409 = vsel %vm404, %v390, 0
        %411 = vmatprep.subr.bf16.mxu0 0
        %412 = vmatpush1.bf16.msra.mxu0 0
        %413 = vmatprep.subr.bf16.mxu0 0
        %414 = vmatpush1.bf16.msra.mxu0 0
        %415 = vmatprep.subr.bf16.mxu0 0
        %416 = vmatpush1.bf16.msra.mxu0 0
        %417 = vmatprep.subr.bf16.mxu0 0
        %418 = vmatpush1.bf16.msra.mxu0 0
        %419 = vmatprep.subr.bf16.mxu0 0
        %420 = vmatpush1.bf16.msra.mxu0 0
        %421 = vmatprep.subr.bf16.mxu0 0
        %422 = vmatpush1.bf16.msra.mxu0 0
        %423 = vmatprep.subr.bf16.mxu0 0
        %424 = vmatpush1.bf16.msra.mxu0 0
        %425 = vmatprep.subr.bf16.mxu0 %v409
        %426 = vmatpush1.bf16.msra.mxu0 %v406
        %427 = vmatprep.subr.bf16.mxu0 0
        %428 = vmatpush2.bf16.msra.mxu0 0
        %429 = vmatprep.subr.bf16.mxu0 0
        %430 = vmatpush2.bf16.msra.mxu0 0
        %431 = vmatprep.subr.bf16.mxu0 0
        %432 = vmatpush2.bf16.msra.mxu0 0
        %433 = vmatprep.subr.bf16.mxu0 0
        %434 = vmatpush2.bf16.msra.mxu0 0
        %435 = vmatprep.subr.bf16.mxu0 0
        %436 = vmatpush2.bf16.msra.mxu0 0
        %437 = vmatprep.subr.bf16.mxu0 0
        %438 = vmatpush2.bf16.msra.mxu0 0
        %439 = vmatprep.subr.bf16.mxu0 0
        %440 = vmatpush2.bf16.msra.mxu0 0
        %441 = vmatprep.subr.bf16.mxu0 0
        %442 = vmatpush2.bf16.msra.mxu0 0
        %443 = vmatprep.mubr.bf16.mxu0 0
        %444 = vmatmul.mubr.bf16.gmra.mxu0 %v393
        %v445 = vpop.f32.mrf.mxu0
        %v446 = vadd.f32 %v329, %v445
        %v447 = vpop.f32.mrf.mxu0
        %v448 = vadd.f32 %v329, %v447
        %v449 = vpop.f32.mrf.mxu0
        %v450 = vadd.f32 %v334, %v449
        %v451 = vpop.f32.mrf.mxu0
        %v452 = vadd.f32 %v334, %v451
        %453 = vmatprep.mubr.bf16.mxu0 0
        %454 = vmatmul.mubr.bf16.gmra.mxu0 %v396
        %v455 = vpop.f32.mrf.mxu0
        %v456 = vadd.f32 %v339, %v455
        %v457 = vpop.f32.mrf.mxu0
        %v458 = vadd.f32 %v339, %v457
        %v459 = vpop.f32.mrf.mxu0
        %v460 = vadd.f32 %v344, %v459
        %v461 = vpop.f32.mrf.mxu0
        %v462 = vadd.f32 %v344, %v461
        %463 = vmatprep.mubr.bf16.mxu0 0
        %464 = vmatmul.mubr.bf16.gmra.mxu0 %v399
        %v465 = vpop.f32.mrf.mxu0
        %v466 = vadd.f32 %v349, %v465
        %v467 = vpop.f32.mrf.mxu0
        %v468 = vadd.f32 %v349, %v467
        %v469 = vpop.f32.mrf.mxu0
        %v470 = vadd.f32 %v354, %v469
        %v471 = vpop.f32.mrf.mxu0
        %v472 = vadd.f32 %v354, %v471
        %473 = vmatprep.mubr.bf16.mxu0 0
        %474 = vmatmul.mubr.bf16.gmra.mxu0 %v402
        %v475 = vpop.f32.mrf.mxu0
        %v476 = vadd.f32 %v359, %v475
        %v477 = vpop.f32.mrf.mxu0
        %v478 = vadd.f32 %v359, %v477
        %v479 = vpop.f32.mrf.mxu0
        %v480 = vadd.f32 %v364, %v479
        %v481 = vpop.f32.mrf.mxu0
        %v482 = vadd.f32 %v364, %v481
        %483 = vdwg.mxu0
        %v484 = vmax.f32 %v446, 0.0
        %v485 = vmax.f32 %v448, 0.0
        %v486 = vmax.f32 %v450, 0.0
        %v487 = vmax.f32 %v452, 0.0
        %v488 = vmax.f32 %v456, 0.0
        %v489 = vmax.f32 %v458, 0.0
        %v490 = vmax.f32 %v460, 0.0
        %v491 = vmax.f32 %v462, 0.0
        %v492 = vmax.f32 %v466, 0.0
        %v493 = vmax.f32 %v468, 0.0
        %v494 = vmax.f32 %v470, 0.0
        %v495 = vmax.f32 %v472, 0.0
        %v496 = vmax.f32 %v476, 0.0
        %v497 = vmax.f32 %v478, 0.0
        %v498 = vmax.f32 %v480, 0.0
        %v499 = vmax.f32 %v482, 0.0
        %v500 = vpack.c.bf16 %v486, %v484
        %v501 = vpack.c.bf16 %v487, %v485
        %v502 = vpack.c.bf16 %v490, %v488
        %v503 = vpack.c.bf16 %v491, %v489
        %v504 = vpack.c.bf16 %v494, %v492
        %v505 = vpack.c.bf16 %v495, %v493
        %v506 = vpack.c.bf16 %v498, %v496
        %v507 = vpack.c.bf16 %v499, %v497
        %v508 = vld [vmem:[%s2] sm:$0xf]
        %v509 = vld [vmem:[%s2 + $0x4] sm:$0xf]
        %v510 = vld [vmem:[%s2 + $0x8] sm:$0xf]
        %v511 = vld [vmem:[%s2 + $0xc] sm:$0xf]
        %v512 = vld [vmem:[%s2 + $0x10] sm:$0xf]
        %v513 = vld [vmem:[%s2 + $0x14] sm:$0xf]
        %v514 = vld [vmem:[%s2 + $0x18] sm:$0xf]
        %v515 = vld [vmem:[%s2 + $0x1c] sm:$0xf]
        %v516 = vld [vmem:[%s6 + $0x40] sm:$0xff]
        %v517 = vld [vmem:[%s6 + $0x48] sm:$0xff]
        %v518 = vld [vmem:[%s6 + $0x50] sm:$0xff]
        %v519 = vld [vmem:[%s6 + $0x58] sm:$0xff]
        %v520 = vld [vmem:[%s6 + $0x60] sm:$0xff]
        %v521 = vld [vmem:[%s6 + $0x68] sm:$0xff]
        %v522 = vld [vmem:[%s6 + $0x70] sm:$0xff]
        %v523 = vld [vmem:[%s6 + $0x78] sm:$0xff]
        %525 = vset.pattern.permute.xlu0 0
        %526 = vperm.xlu0 %525, %v516
        %v527 = vpop.permute.xlu0 %526
        %530 = vset.pattern.permute.xlu0 0
        %531 = vperm.xlu0 %530, %v517
        %v532 = vpop.permute.xlu0 %531
        %535 = vset.pattern.permute.xlu0 0
        %536 = vperm.xlu0 %535, %v518
        %v537 = vpop.permute.xlu0 %536
        %540 = vset.pattern.permute.xlu0 0
        %541 = vperm.xlu0 %540, %v519
        %v542 = vpop.permute.xlu0 %541
        %545 = vset.pattern.permute.xlu0 0
        %546 = vperm.xlu0 %545, %v520
        %v547 = vpop.permute.xlu0 %546
        %550 = vset.pattern.permute.xlu0 0
        %551 = vperm.xlu0 %550, %v521
        %v552 = vpop.permute.xlu0 %551
        %555 = vset.pattern.permute.xlu0 0
        %556 = vperm.xlu0 %555, %v522
        %v557 = vpop.permute.xlu0 %556
        %560 = vset.pattern.permute.xlu0 0
        %561 = vperm.xlu0 %560, %v523
        %v562 = vpop.permute.xlu0 %561
        %v572 = vunpack.c.l.b16 %v508
        %v573 = vunpack.c.l.b16 %v509
        %v574 = vunpack.c.l.b16 %v510
        %v575 = vunpack.c.l.b16 %v511
        %v576 = vunpack.c.l.b16 %v512
        %v577 = vunpack.c.l.b16 %v513
        %v578 = vunpack.c.l.b16 %v514
        %v579 = vunpack.c.l.b16 %v515
        %v580 = vpack.c.b16 %v573, %v572
        %v581 = vpack.c.b16 %v575, %v574
        %v582 = vpack.c.b16 %v577, %v576
        %v583 = vpack.c.b16 %v579, %v578
        %vm584 = vcmask 523264
        %v586 = vsel %vm584, %v580, 0
        %v589 = vsel %vm584, %v581, 0
        %v592 = vsel %vm584, %v582, 0
        %v595 = vsel %vm584, %v583, 0
        %597 = vmatprep.subr.bf16.mxu0 0
        %598 = vmatpush1.bf16.msra.mxu0 0
        %599 = vmatprep.subr.bf16.mxu0 0
        %600 = vmatpush1.bf16.msra.mxu0 0
        %601 = vmatprep.subr.bf16.mxu0 0
        %602 = vmatpush1.bf16.msra.mxu0 0
        %603 = vmatprep.subr.bf16.mxu0 0
        %604 = vmatpush1.bf16.msra.mxu0 0
        %605 = vmatprep.subr.bf16.mxu0 %v507
        %606 = vmatpush1.bf16.msra.mxu0 %v506
        %607 = vmatprep.subr.bf16.mxu0 %v505
        %608 = vmatpush1.bf16.msra.mxu0 %v504
        %609 = vmatprep.subr.bf16.mxu0 %v503
        %610 = vmatpush1.bf16.msra.mxu0 %v502
        %611 = vmatprep.subr.bf16.mxu0 %v501
        %612 = vmatpush1.bf16.msra.mxu0 %v500
        %613 = vmatprep.subr.bf16.mxu0 0
        %614 = vmatpush2.bf16.msra.mxu0 0
        %615 = vmatprep.subr.bf16.mxu0 0
        %616 = vmatpush2.bf16.msra.mxu0 0
        %617 = vmatprep.subr.bf16.mxu0 0
        %618 = vmatpush2.bf16.msra.mxu0 0
        %619 = vmatprep.subr.bf16.mxu0 0
        %620 = vmatpush2.bf16.msra.mxu0 0
        %621 = vmatprep.subr.bf16.mxu0 0
        %622 = vmatpush2.bf16.msra.mxu0 0
        %623 = vmatprep.subr.bf16.mxu0 0
        %624 = vmatpush2.bf16.msra.mxu0 0
        %625 = vmatprep.subr.bf16.mxu0 0
        %626 = vmatpush2.bf16.msra.mxu0 0
        %627 = vmatprep.subr.bf16.mxu0 0
        %628 = vmatpush2.bf16.msra.mxu0 0
        %629 = vmatprep.mubr.bf16.mxu0 0
        %630 = vmatmul.mubr.bf16.gmra.mxu0 %v586
        %v631 = vpop.f32.mrf.mxu0
        %v632 = vadd.f32 %v527, %v631
        %v633 = vpop.f32.mrf.mxu0
        %v634 = vadd.f32 %v527, %v633
        %v635 = vpop.f32.mrf.mxu0
        %v636 = vadd.f32 %v532, %v635
        %v637 = vpop.f32.mrf.mxu0
        %v638 = vadd.f32 %v532, %v637
        %639 = vmatprep.mubr.bf16.mxu0 0
        %640 = vmatmul.mubr.bf16.gmra.mxu0 %v589
        %v641 = vpop.f32.mrf.mxu0
        %v642 = vadd.f32 %v537, %v641
        %v643 = vpop.f32.mrf.mxu0
        %v644 = vadd.f32 %v537, %v643
        %v645 = vpop.f32.mrf.mxu0
        %v646 = vadd.f32 %v542, %v645
        %v647 = vpop.f32.mrf.mxu0
        %v648 = vadd.f32 %v542, %v647
        %649 = vmatprep.mubr.bf16.mxu0 0
        %650 = vmatmul.mubr.bf16.gmra.mxu0 %v592
        %v651 = vpop.f32.mrf.mxu0
        %v652 = vadd.f32 %v547, %v651
        %v653 = vpop.f32.mrf.mxu0
        %v654 = vadd.f32 %v547, %v653
        %v655 = vpop.f32.mrf.mxu0
        %v656 = vadd.f32 %v552, %v655
        %v657 = vpop.f32.mrf.mxu0
        %v658 = vadd.f32 %v552, %v657
        %659 = vmatprep.mubr.bf16.mxu0 0
        %660 = vmatmul.mubr.bf16.gmra.mxu0 %v595
        %v661 = vpop.f32.mrf.mxu0
        %v662 = vadd.f32 %v557, %v661
        %v663 = vpop.f32.mrf.mxu0
        %v664 = vadd.f32 %v557, %v663
        %v665 = vpop.f32.mrf.mxu0
        %v666 = vadd.f32 %v562, %v665
        %v667 = vpop.f32.mrf.mxu0
        %v668 = vadd.f32 %v562, %v667
        %669 = vdwg.mxu0
        %v670 = vmax.f32 %v632, 0.0
        %v671 = vmax.f32 %v634, 0.0
        %v672 = vmax.f32 %v636, 0.0
        %v673 = vmax.f32 %v638, 0.0
        %v674 = vmax.f32 %v642, 0.0
        %v675 = vmax.f32 %v644, 0.0
        %v676 = vmax.f32 %v646, 0.0
        %v677 = vmax.f32 %v648, 0.0
        %v678 = vmax.f32 %v652, 0.0
        %v679 = vmax.f32 %v654, 0.0
        %v680 = vmax.f32 %v656, 0.0
        %v681 = vmax.f32 %v658, 0.0
        %v682 = vmax.f32 %v662, 0.0
        %v683 = vmax.f32 %v664, 0.0
        %v684 = vmax.f32 %v666, 0.0
        %v685 = vmax.f32 %v668, 0.0
        %v686 = vpack.c.bf16 %v672, %v670
        %v687 = vpack.c.bf16 %v673, %v671
        %v688 = vpack.c.bf16 %v676, %v674
        %v689 = vpack.c.bf16 %v677, %v675
        %v690 = vpack.c.bf16 %v680, %v678
        %v691 = vpack.c.bf16 %v681, %v679
        %v692 = vpack.c.bf16 %v684, %v682
        %v693 = vpack.c.bf16 %v685, %v683
        %v694 = vld [vmem:[%s3] sm:$0xf]
        %v695 = vld [vmem:[%s3 + $0x4] sm:$0xf]
        %v696 = vld [vmem:[%s3 + $0x8] sm:$0xf]
        %v697 = vld [vmem:[%s3 + $0xc] sm:$0xf]
        %v698 = vld [vmem:[%s3 + $0x10] sm:$0xf]
        %v699 = vld [vmem:[%s3 + $0x14] sm:$0xf]
        %v700 = vld [vmem:[%s3 + $0x18] sm:$0xf]
        %v701 = vld [vmem:[%s3 + $0x1c] sm:$0xf]
        %v702 = vld [vmem:[%s6 + $0x80] sm:$0xff]
        %v703 = vld [vmem:[%s6 + $0x88] sm:$0xff]
        %v704 = vld [vmem:[%s6 + $0x90] sm:$0xff]
        %v705 = vld [vmem:[%s6 + $0x98] sm:$0xff]
        %v706 = vld [vmem:[%s6 + $0xa0] sm:$0xff]
        %v707 = vld [vmem:[%s6 + $0xa8] sm:$0xff]
        %v708 = vld [vmem:[%s6 + $0xb0] sm:$0xff]
        %v709 = vld [vmem:[%s6 + $0xb8] sm:$0xff]
        %711 = vset.pattern.permute.xlu0 0
        %712 = vperm.xlu0 %711, %v702
        %v713 = vpop.permute.xlu0 %712
        %716 = vset.pattern.permute.xlu0 0
        %717 = vperm.xlu0 %716, %v703
        %v718 = vpop.permute.xlu0 %717
        %721 = vset.pattern.permute.xlu0 0
        %722 = vperm.xlu0 %721, %v704
        %v723 = vpop.permute.xlu0 %722
        %726 = vset.pattern.permute.xlu0 0
        %727 = vperm.xlu0 %726, %v705
        %v728 = vpop.permute.xlu0 %727
        %731 = vset.pattern.permute.xlu0 0
        %732 = vperm.xlu0 %731, %v706
        %v733 = vpop.permute.xlu0 %732
        %736 = vset.pattern.permute.xlu0 0
        %737 = vperm.xlu0 %736, %v707
        %v738 = vpop.permute.xlu0 %737
        %741 = vset.pattern.permute.xlu0 0
        %742 = vperm.xlu0 %741, %v708
        %v743 = vpop.permute.xlu0 %742
        %746 = vset.pattern.permute.xlu0 0
        %747 = vperm.xlu0 %746, %v709
        %v748 = vpop.permute.xlu0 %747
        %v758 = vunpack.c.l.b16 %v694
        %v759 = vunpack.c.l.b16 %v695
        %v760 = vunpack.c.l.b16 %v696
        %v761 = vunpack.c.l.b16 %v697
        %v762 = vunpack.c.l.b16 %v698
        %v763 = vunpack.c.l.b16 %v699
        %v764 = vunpack.c.l.b16 %v700
        %v765 = vunpack.c.l.b16 %v701
        %v766 = vpack.c.b16 %v759, %v758
        %v767 = vpack.c.b16 %v761, %v760
        %v768 = vpack.c.b16 %v763, %v762
        %v769 = vpack.c.b16 %v765, %v764
        %v771 = vsel %vm584, %v766, 0
        %v774 = vsel %vm584, %v767, 0
        %v777 = vsel %vm584, %v768, 0
        %v780 = vsel %vm584, %v769, 0
        %782 = vmatprep.subr.bf16.mxu0 0
        %783 = vmatpush1.bf16.msra.mxu0 0
        %784 = vmatprep.subr.bf16.mxu0 0
        %785 = vmatpush1.bf16.msra.mxu0 0
        %786 = vmatprep.subr.bf16.mxu0 0
        %787 = vmatpush1.bf16.msra.mxu0 0
        %788 = vmatprep.subr.bf16.mxu0 0
        %789 = vmatpush1.bf16.msra.mxu0 0
        %790 = vmatprep.subr.bf16.mxu0 %v693
        %791 = vmatpush1.bf16.msra.mxu0 %v692
        %792 = vmatprep.subr.bf16.mxu0 %v691
        %793 = vmatpush1.bf16.msra.mxu0 %v690
        %794 = vmatprep.subr.bf16.mxu0 %v689
        %795 = vmatpush1.bf16.msra.mxu0 %v688
        %796 = vmatprep.subr.bf16.mxu0 %v687
        %797 = vmatpush1.bf16.msra.mxu0 %v686
        %798 = vmatprep.subr.bf16.mxu0 0
        %799 = vmatpush2.bf16.msra.mxu0 0
        %800 = vmatprep.subr.bf16.mxu0 0
        %801 = vmatpush2.bf16.msra.mxu0 0
        %802 = vmatprep.subr.bf16.mxu0 0
        %803 = vmatpush2.bf16.msra.mxu0 0
        %804 = vmatprep.subr.bf16.mxu0 0
        %805 = vmatpush2.bf16.msra.mxu0 0
        %806 = vmatprep.subr.bf16.mxu0 0
        %807 = vmatpush2.bf16.msra.mxu0 0
        %808 = vmatprep.subr.bf16.mxu0 0
        %809 = vmatpush2.bf16.msra.mxu0 0
        %810 = vmatprep.subr.bf16.mxu0 0
        %811 = vmatpush2.bf16.msra.mxu0 0
        %812 = vmatprep.subr.bf16.mxu0 0
        %813 = vmatpush2.bf16.msra.mxu0 0
        %814 = vmatprep.mubr.bf16.mxu0 0
        %815 = vmatmul.mubr.bf16.gmra.mxu0 %v771
        %v816 = vpop.f32.mrf.mxu0
        %v817 = vadd.f32 %v713, %v816
        %v818 = vpop.f32.mrf.mxu0
        %v819 = vadd.f32 %v713, %v818
        %v820 = vpop.f32.mrf.mxu0
        %v821 = vadd.f32 %v718, %v820
        %v822 = vpop.f32.mrf.mxu0
        %v823 = vadd.f32 %v718, %v822
        %824 = vmatprep.mubr.bf16.mxu0 0
        %825 = vmatmul.mubr.bf16.gmra.mxu0 %v774
        %v826 = vpop.f32.mrf.mxu0
        %v827 = vadd.f32 %v723, %v826
        %v828 = vpop.f32.mrf.mxu0
        %v829 = vadd.f32 %v723, %v828
        %v830 = vpop.f32.mrf.mxu0
        %v831 = vadd.f32 %v728, %v830
        %v832 = vpop.f32.mrf.mxu0
        %v833 = vadd.f32 %v728, %v832
        %834 = vmatprep.mubr.bf16.mxu0 0
        %835 = vmatmul.mubr.bf16.gmra.mxu0 %v777
        %v836 = vpop.f32.mrf.mxu0
        %v837 = vadd.f32 %v733, %v836
        %v838 = vpop.f32.mrf.mxu0
        %v839 = vadd.f32 %v733, %v838
        %v840 = vpop.f32.mrf.mxu0
        %v841 = vadd.f32 %v738, %v840
        %v842 = vpop.f32.mrf.mxu0
        %v843 = vadd.f32 %v738, %v842
        %844 = vmatprep.mubr.bf16.mxu0 0
        %845 = vmatmul.mubr.bf16.gmra.mxu0 %v780
        %v846 = vpop.f32.mrf.mxu0
        %v847 = vadd.f32 %v743, %v846
        %v848 = vpop.f32.mrf.mxu0
        %v849 = vadd.f32 %v743, %v848
        %v850 = vpop.f32.mrf.mxu0
        %v851 = vadd.f32 %v748, %v850
        %v852 = vpop.f32.mrf.mxu0
        %v853 = vadd.f32 %v748, %v852
        %854 = vdwg.mxu0
        %v855 = vmax.f32 %v817, 0.0
        %v856 = vmax.f32 %v819, 0.0
        %v857 = vmax.f32 %v821, 0.0
        %v858 = vmax.f32 %v823, 0.0
        %v859 = vmax.f32 %v827, 0.0
        %v860 = vmax.f32 %v829, 0.0
        %v861 = vmax.f32 %v831, 0.0
        %v862 = vmax.f32 %v833, 0.0
        %v863 = vmax.f32 %v837, 0.0
        %v864 = vmax.f32 %v839, 0.0
        %v865 = vmax.f32 %v841, 0.0
        %v866 = vmax.f32 %v843, 0.0
        %v867 = vmax.f32 %v847, 0.0
        %v868 = vmax.f32 %v849, 0.0
        %v869 = vmax.f32 %v851, 0.0
        %v870 = vmax.f32 %v853, 0.0
        %v871 = vpack.c.bf16 %v857, %v855
        %v872 = vpack.c.bf16 %v858, %v856
        %v873 = vpack.c.bf16 %v861, %v859
        %v874 = vpack.c.bf16 %v862, %v860
        %v875 = vpack.c.bf16 %v865, %v863
        %v876 = vpack.c.bf16 %v866, %v864
        %v877 = vpack.c.bf16 %v869, %v867
        %v878 = vpack.c.bf16 %v870, %v868
        %v879 = vld [vmem:[%s4] sm:$0xf]
        %v880 = vld [vmem:[%s4 + $0x4] sm:$0xf]
        %v881 = vld [vmem:[%s4 + $0x8] sm:$0xf]
        %v882 = vld [vmem:[%s4 + $0xc] sm:$0xf]
        %v883 = vld [vmem:[%s4 + $0x10] sm:$0xf]
        %v884 = vld [vmem:[%s4 + $0x14] sm:$0xf]
        %v885 = vld [vmem:[%s4 + $0x18] sm:$0xf]
        %v886 = vld [vmem:[%s4 + $0x1c] sm:$0xf]
        %v887 = vld [vmem:[%s4 + $0x20] sm:$0xf]
        %v888 = vld [vmem:[%s4 + $0x24] sm:$0xf]
        %v889 = vld [vmem:[%s4 + $0x28] sm:$0xf]
        %v890 = vld [vmem:[%s4 + $0x2c] sm:$0xf]
        %v891 = vld [vmem:[%s4 + $0x30] sm:$0xf]
        %v892 = vld [vmem:[%s4 + $0x34] sm:$0xf]
        %v893 = vld [vmem:[%s4 + $0x38] sm:$0xf]
        %v894 = vld [vmem:[%s4 + $0x3c] sm:$0xf]
        %v895 = vld [vmem:[%s6 + $0xc0] sm:$0xff]
        %v896 = vld [vmem:[%s6 + $0xc8] sm:$0xff]
        %v897 = vld [vmem:[%s6 + $0xd0] sm:$0xff]
        %v898 = vld [vmem:[%s6 + $0xd8] sm:$0xff]
        %v899 = vld [vmem:[%s6 + $0xe0] sm:$0xff]
        %v900 = vld [vmem:[%s6 + $0xe8] sm:$0xff]
        %v901 = vld [vmem:[%s6 + $0xf0] sm:$0xff]
        %v902 = vld [vmem:[%s6 + $0xf8] sm:$0xff]
        %v903 = vld [vmem:[%s6 + $0x100] sm:$0xff]
        %v904 = vld [vmem:[%s6 + $0x108] sm:$0xff]
        %v905 = vld [vmem:[%s6 + $0x110] sm:$0xff]
        %v906 = vld [vmem:[%s6 + $0x118] sm:$0xff]
        %v907 = vld [vmem:[%s6 + $0x120] sm:$0xff]
        %v908 = vld [vmem:[%s6 + $0x128] sm:$0xff]
        %v909 = vld [vmem:[%s6 + $0x130] sm:$0xff]
        %v910 = vld [vmem:[%s6 + $0x138] sm:$0xff]
        %912 = vset.pattern.permute.xlu0 0
        %913 = vperm.xlu0 %912, %v895
        %v914 = vpop.permute.xlu0 %913
        %917 = vset.pattern.permute.xlu0 0
        %918 = vperm.xlu0 %917, %v896
        %v919 = vpop.permute.xlu0 %918
        %922 = vset.pattern.permute.xlu0 0
        %923 = vperm.xlu0 %922, %v897
        %v924 = vpop.permute.xlu0 %923
        %927 = vset.pattern.permute.xlu0 0
        %928 = vperm.xlu0 %927, %v898
        %v929 = vpop.permute.xlu0 %928
        %932 = vset.pattern.permute.xlu0 0
        %933 = vperm.xlu0 %932, %v899
        %v934 = vpop.permute.xlu0 %933
        %937 = vset.pattern.permute.xlu0 0
        %938 = vperm.xlu0 %937, %v900
        %v939 = vpop.permute.xlu0 %938
        %942 = vset.pattern.permute.xlu0 0
        %943 = vperm.xlu0 %942, %v901
        %v944 = vpop.permute.xlu0 %943
        %947 = vset.pattern.permute.xlu0 0
        %948 = vperm.xlu0 %947, %v902
        %v949 = vpop.permute.xlu0 %948
        %952 = vset.pattern.permute.xlu0 0
        %953 = vperm.xlu0 %952, %v903
        %v954 = vpop.permute.xlu0 %953
        %957 = vset.pattern.permute.xlu0 0
        %958 = vperm.xlu0 %957, %v904
        %v959 = vpop.permute.xlu0 %958
        %962 = vset.pattern.permute.xlu0 0
        %963 = vperm.xlu0 %962, %v905
        %v964 = vpop.permute.xlu0 %963
        %967 = vset.pattern.permute.xlu0 0
        %968 = vperm.xlu0 %967, %v906
        %v969 = vpop.permute.xlu0 %968
        %972 = vset.pattern.permute.xlu0 0
        %973 = vperm.xlu0 %972, %v907
        %v974 = vpop.permute.xlu0 %973
        %977 = vset.pattern.permute.xlu0 0
        %978 = vperm.xlu0 %977, %v908
        %v979 = vpop.permute.xlu0 %978
        %982 = vset.pattern.permute.xlu0 0
        %983 = vperm.xlu0 %982, %v909
        %v984 = vpop.permute.xlu0 %983
        %987 = vset.pattern.permute.xlu0 0
        %988 = vperm.xlu0 %987, %v910
        %v989 = vpop.permute.xlu0 %988
        %v1007 = vunpack.c.l.b16 %v879
        %v1008 = vunpack.c.l.b16 %v880
        %v1009 = vunpack.c.l.b16 %v881
        %v1010 = vunpack.c.l.b16 %v882
        %v1011 = vunpack.c.l.b16 %v883
        %v1012 = vunpack.c.l.b16 %v884
        %v1013 = vunpack.c.l.b16 %v885
        %v1014 = vunpack.c.l.b16 %v886
        %v1015 = vunpack.c.l.b16 %v887
        %v1016 = vunpack.c.l.b16 %v888
        %v1017 = vunpack.c.l.b16 %v889
        %v1018 = vunpack.c.l.b16 %v890
        %v1019 = vunpack.c.l.b16 %v891
        %v1020 = vunpack.c.l.b16 %v892
        %v1021 = vunpack.c.l.b16 %v893
        %v1022 = vunpack.c.l.b16 %v894
        %v1023 = vpack.c.b16 %v1008, %v1007
        %v1024 = vpack.c.b16 %v1010, %v1009
        %v1025 = vpack.c.b16 %v1012, %v1011
        %v1026 = vpack.c.b16 %v1014, %v1013
        %v1027 = vpack.c.b16 %v1016, %v1015
        %v1028 = vpack.c.b16 %v1018, %v1017
        %v1029 = vpack.c.b16 %v1020, %v1019
        %v1030 = vpack.c.b16 %v1022, %v1021
        %v1032 = vsel %vm584, %v1023, 0
        %v1035 = vsel %vm584, %v1024, 0
        %v1038 = vsel %vm584, %v1025, 0
        %v1041 = vsel %vm584, %v1026, 0
        %v1044 = vsel %vm584, %v1027, 0
        %v1047 = vsel %vm584, %v1028, 0
        %v1050 = vsel %vm584, %v1029, 0
        %v1053 = vsel %vm584, %v1030, 0
        %1055 = vmatprep.subr.bf16.mxu0 0
        %1056 = vmatpush1.bf16.msra.mxu0 0
        %1057 = vmatprep.subr.bf16.mxu0 0
        %1058 = vmatpush1.bf16.msra.mxu0 0
        %1059 = vmatprep.subr.bf16.mxu0 0
        %1060 = vmatpush1.bf16.msra.mxu0 0
        %1061 = vmatprep.subr.bf16.mxu0 0
        %1062 = vmatpush1.bf16.msra.mxu0 0
        %1063 = vmatprep.subr.bf16.mxu0 %v878
        %1064 = vmatpush1.bf16.msra.mxu0 %v877
        %1065 = vmatprep.subr.bf16.mxu0 %v876
        %1066 = vmatpush1.bf16.msra.mxu0 %v875
        %1067 = vmatprep.subr.bf16.mxu0 %v874
        %1068 = vmatpush1.bf16.msra.mxu0 %v873
        %1069 = vmatprep.subr.bf16.mxu0 %v872
        %1070 = vmatpush1.bf16.msra.mxu0 %v871
        %1071 = vmatprep.subr.bf16.mxu0 0
        %1072 = vmatpush2.bf16.msra.mxu0 0
        %1073 = vmatprep.subr.bf16.mxu0 0
        %1074 = vmatpush2.bf16.msra.mxu0 0
        %1075 = vmatprep.subr.bf16.mxu0 0
        %1076 = vmatpush2.bf16.msra.mxu0 0
        %1077 = vmatprep.subr.bf16.mxu0 0
        %1078 = vmatpush2.bf16.msra.mxu0 0
        %1079 = vmatprep.subr.bf16.mxu0 0
        %1080 = vmatpush2.bf16.msra.mxu0 0
        %1081 = vmatprep.subr.bf16.mxu0 0
        %1082 = vmatpush2.bf16.msra.mxu0 0
        %1083 = vmatprep.subr.bf16.mxu0 0
        %1084 = vmatpush2.bf16.msra.mxu0 0
        %1085 = vmatprep.subr.bf16.mxu0 0
        %1086 = vmatpush2.bf16.msra.mxu0 0
        %1087 = vmatprep.mubr.bf16.mxu0 0
        %1088 = vmatmul.mubr.bf16.gmra.mxu0 %v1032
        %v1089 = vpop.f32.mrf.mxu0
        %v1090 = vadd.f32 %v914, %v1089
        %v1091 = vpop.f32.mrf.mxu0
        %v1092 = vadd.f32 %v914, %v1091
        %v1093 = vpop.f32.mrf.mxu0
        %v1094 = vadd.f32 %v919, %v1093
        %v1095 = vpop.f32.mrf.mxu0
        %v1096 = vadd.f32 %v919, %v1095
        %1097 = vmatprep.mubr.bf16.mxu0 0
        %1098 = vmatmul.mubr.bf16.gmra.mxu0 %v1035
        %v1099 = vpop.f32.mrf.mxu0
        %v1100 = vadd.f32 %v924, %v1099
        %v1101 = vpop.f32.mrf.mxu0
        %v1102 = vadd.f32 %v924, %v1101
        %v1103 = vpop.f32.mrf.mxu0
        %v1104 = vadd.f32 %v929, %v1103
        %v1105 = vpop.f32.mrf.mxu0
        %v1106 = vadd.f32 %v929, %v1105
        %1107 = vmatprep.mubr.bf16.mxu0 0
        %1108 = vmatmul.mubr.bf16.gmra.mxu0 %v1038
        %v1109 = vpop.f32.mrf.mxu0
        %v1110 = vadd.f32 %v934, %v1109
        %v1111 = vpop.f32.mrf.mxu0
        %v1112 = vadd.f32 %v934, %v1111
        %v1113 = vpop.f32.mrf.mxu0
        %v1114 = vadd.f32 %v939, %v1113
        %v1115 = vpop.f32.mrf.mxu0
        %v1116 = vadd.f32 %v939, %v1115
        %1117 = vmatprep.mubr.bf16.mxu0 0
        %1118 = vmatmul.mubr.bf16.gmra.mxu0 %v1041
        %v1119 = vpop.f32.mrf.mxu0
        %v1120 = vadd.f32 %v944, %v1119
        %v1121 = vpop.f32.mrf.mxu0
        %v1122 = vadd.f32 %v944, %v1121
        %v1123 = vpop.f32.mrf.mxu0
        %v1124 = vadd.f32 %v949, %v1123
        %v1125 = vpop.f32.mrf.mxu0
        %v1126 = vadd.f32 %v949, %v1125
        %1127 = vmatprep.mubr.bf16.mxu0 0
        %1128 = vmatmul.mubr.bf16.gmra.mxu0 %v1044
        %v1129 = vpop.f32.mrf.mxu0
        %v1130 = vadd.f32 %v954, %v1129
        %v1131 = vpop.f32.mrf.mxu0
        %v1132 = vadd.f32 %v954, %v1131
        %v1133 = vpop.f32.mrf.mxu0
        %v1134 = vadd.f32 %v959, %v1133
        %v1135 = vpop.f32.mrf.mxu0
        %v1136 = vadd.f32 %v959, %v1135
        %1137 = vmatprep.mubr.bf16.mxu0 0
        %1138 = vmatmul.mubr.bf16.gmra.mxu0 %v1047
        %v1139 = vpop.f32.mrf.mxu0
        %v1140 = vadd.f32 %v964, %v1139
        %v1141 = vpop.f32.mrf.mxu0
        %v1142 = vadd.f32 %v964, %v1141
        %v1143 = vpop.f32.mrf.mxu0
        %v1144 = vadd.f32 %v969, %v1143
        %v1145 = vpop.f32.mrf.mxu0
        %v1146 = vadd.f32 %v969, %v1145
        %1147 = vmatprep.mubr.bf16.mxu0 0
        %1148 = vmatmul.mubr.bf16.gmra.mxu0 %v1050
        %v1149 = vpop.f32.mrf.mxu0
        %v1150 = vadd.f32 %v974, %v1149
        %v1151 = vpop.f32.mrf.mxu0
        %v1152 = vadd.f32 %v974, %v1151
        %v1153 = vpop.f32.mrf.mxu0
        %v1154 = vadd.f32 %v979, %v1153
        %v1155 = vpop.f32.mrf.mxu0
        %v1156 = vadd.f32 %v979, %v1155
        %1157 = vmatprep.mubr.bf16.mxu0 0
        %1158 = vmatmul.mubr.bf16.gmra.mxu0 %v1053
        %v1159 = vpop.f32.mrf.mxu0
        %v1160 = vadd.f32 %v984, %v1159
        %v1161 = vpop.f32.mrf.mxu0
        %v1162 = vadd.f32 %v984, %v1161
        %v1163 = vpop.f32.mrf.mxu0
        %v1164 = vadd.f32 %v989, %v1163
        %v1165 = vpop.f32.mrf.mxu0
        %v1166 = vadd.f32 %v989, %v1165
        %1167 = vdwg.mxu0
        %v1168 = vmax.f32 %v1090, 0.0
        %v1169 = vmax.f32 %v1092, 0.0
        %v1170 = vmax.f32 %v1094, 0.0
        %v1171 = vmax.f32 %v1096, 0.0
        %v1172 = vmax.f32 %v1100, 0.0
        %v1173 = vmax.f32 %v1102, 0.0
        %v1174 = vmax.f32 %v1104, 0.0
        %v1175 = vmax.f32 %v1106, 0.0
        %v1176 = vmax.f32 %v1110, 0.0
        %v1177 = vmax.f32 %v1112, 0.0
        %v1178 = vmax.f32 %v1114, 0.0
        %v1179 = vmax.f32 %v1116, 0.0
        %v1180 = vmax.f32 %v1120, 0.0
        %v1181 = vmax.f32 %v1122, 0.0
        %v1182 = vmax.f32 %v1124, 0.0
        %v1183 = vmax.f32 %v1126, 0.0
        %v1184 = vmax.f32 %v1130, 0.0
        %v1185 = vmax.f32 %v1132, 0.0
        %v1186 = vmax.f32 %v1134, 0.0
        %v1187 = vmax.f32 %v1136, 0.0
        %v1188 = vmax.f32 %v1140, 0.0
        %v1189 = vmax.f32 %v1142, 0.0
        %v1190 = vmax.f32 %v1144, 0.0
        %v1191 = vmax.f32 %v1146, 0.0
        %v1192 = vmax.f32 %v1150, 0.0
        %v1193 = vmax.f32 %v1152, 0.0
        %v1194 = vmax.f32 %v1154, 0.0
        %v1195 = vmax.f32 %v1156, 0.0
        %v1196 = vmax.f32 %v1160, 0.0
        %v1197 = vmax.f32 %v1162, 0.0
        %v1198 = vmax.f32 %v1164, 0.0
        %v1199 = vmax.f32 %v1166, 0.0
        %v1200 = vpack.c.bf16 %v1170, %v1168
        %v1201 = vpack.c.bf16 %v1171, %v1169
        %v1202 = vpack.c.bf16 %v1174, %v1172
        %v1203 = vpack.c.bf16 %v1175, %v1173
        %v1204 = vpack.c.bf16 %v1178, %v1176
        %v1205 = vpack.c.bf16 %v1179, %v1177
        %v1206 = vpack.c.bf16 %v1182, %v1180
        %v1207 = vpack.c.bf16 %v1183, %v1181
        %v1208 = vpack.c.bf16 %v1186, %v1184
        %v1209 = vpack.c.bf16 %v1187, %v1185
        %v1210 = vpack.c.bf16 %v1190, %v1188
        %v1211 = vpack.c.bf16 %v1191, %v1189
        %v1212 = vpack.c.bf16 %v1194, %v1192
        %v1213 = vpack.c.bf16 %v1195, %v1193
        %v1214 = vpack.c.bf16 %v1198, %v1196
        %v1215 = vpack.c.bf16 %v1199, %v1197
        %v1216 = vld [vmem:[%s5] sm:$0xf]
        %v1217 = vld [vmem:[%s5 + $0x4] sm:$0xf]
        %v1218 = vld [vmem:[%s5 + $0x8] sm:$0xf]
        %v1219 = vld [vmem:[%s5 + $0xc] sm:$0xf]
        %v1220 = vld [vmem:[%s5 + $0x10] sm:$0xf]
        %v1221 = vld [vmem:[%s5 + $0x14] sm:$0xf]
        %v1222 = vld [vmem:[%s5 + $0x18] sm:$0xf]
        %v1223 = vld [vmem:[%s5 + $0x1c] sm:$0xf]
        %v1224 = vld [vmem:[%s5 + $0x20] sm:$0xf]
        %v1225 = vld [vmem:[%s5 + $0x24] sm:$0xf]
        %v1226 = vld [vmem:[%s5 + $0x28] sm:$0xf]
        %v1227 = vld [vmem:[%s5 + $0x2c] sm:$0xf]
        %v1228 = vld [vmem:[%s5 + $0x30] sm:$0xf]
        %v1229 = vld [vmem:[%s5 + $0x34] sm:$0xf]
        %v1230 = vld [vmem:[%s5 + $0x38] sm:$0xf]
        %v1231 = vld [vmem:[%s5 + $0x3c] sm:$0xf]
        %v1232 = vld [vmem:[%s5 + $0x40] sm:$0xf]
        %v1233 = vld [vmem:[%s5 + $0x44] sm:$0xf]
        %v1234 = vld [vmem:[%s5 + $0x48] sm:$0xf]
        %v1235 = vld [vmem:[%s5 + $0x4c] sm:$0xf]
        %v1236 = vld [vmem:[%s5 + $0x50] sm:$0xf]
        %v1237 = vld [vmem:[%s5 + $0x54] sm:$0xf]
        %v1238 = vld [vmem:[%s5 + $0x58] sm:$0xf]
        %v1239 = vld [vmem:[%s5 + $0x5c] sm:$0xf]
        %v1240 = vld [vmem:[%s5 + $0x60] sm:$0xf]
        %v1241 = vld [vmem:[%s5 + $0x64] sm:$0xf]
        %v1242 = vld [vmem:[%s5 + $0x68] sm:$0xf]
        %v1243 = vld [vmem:[%s5 + $0x6c] sm:$0xf]
        %v1244 = vld [vmem:[%s5 + $0x70] sm:$0xf]
        %v1245 = vld [vmem:[%s5 + $0x74] sm:$0xf]
        %v1246 = vld [vmem:[%s5 + $0x78] sm:$0xf]
        %v1247 = vld [vmem:[%s5 + $0x7c] sm:$0xf]
        %v1248 = vld [vmem:[%s6 + $0x140] sm:$0xff]
        %v1249 = vld [vmem:[%s6 + $0x148] sm:$0xff]
        %v1250 = vld [vmem:[%s6 + $0x150] sm:$0xff]
        %v1251 = vld [vmem:[%s6 + $0x158] sm:$0xff]
        %v1252 = vld [vmem:[%s6 + $0x160] sm:$0xff]
        %v1253 = vld [vmem:[%s6 + $0x168] sm:$0xff]
        %v1254 = vld [vmem:[%s6 + $0x170] sm:$0xff]
        %v1255 = vld [vmem:[%s6 + $0x178] sm:$0xff]
        %v1256 = vld [vmem:[%s6 + $0x180] sm:$0xff]
        %v1257 = vld [vmem:[%s6 + $0x188] sm:$0xff]
        %v1258 = vld [vmem:[%s6 + $0x190] sm:$0xff]
        %v1259 = vld [vmem:[%s6 + $0x198] sm:$0xff]
        %v1260 = vld [vmem:[%s6 + $0x1a0] sm:$0xff]
        %v1261 = vld [vmem:[%s6 + $0x1a8] sm:$0xff]
        %v1262 = vld [vmem:[%s6 + $0x1b0] sm:$0xff]
        %v1263 = vld [vmem:[%s6 + $0x1b8] sm:$0xff]
        %v1264 = vld [vmem:[%s6 + $0x1c0] sm:$0xff]
        %v1265 = vld [vmem:[%s6 + $0x1c8] sm:$0xff]
        %v1266 = vld [vmem:[%s6 + $0x1d0] sm:$0xff]
        %v1267 = vld [vmem:[%s6 + $0x1d8] sm:$0xff]
        %v1268 = vld [vmem:[%s6 + $0x1e0] sm:$0xff]
        %v1269 = vld [vmem:[%s6 + $0x1e8] sm:$0xff]
        %v1270 = vld [vmem:[%s6 + $0x1f0] sm:$0xff]
        %v1271 = vld [vmem:[%s6 + $0x1f8] sm:$0xff]
        %v1272 = vld [vmem:[%s6 + $0x200] sm:$0xff]
        %v1273 = vld [vmem:[%s6 + $0x208] sm:$0xff]
        %v1274 = vld [vmem:[%s6 + $0x210] sm:$0xff]
        %v1275 = vld [vmem:[%s6 + $0x218] sm:$0xff]
        %v1276 = vld [vmem:[%s6 + $0x220] sm:$0xff]
        %v1277 = vld [vmem:[%s6 + $0x228] sm:$0xff]
        %v1278 = vld [vmem:[%s6 + $0x230] sm:$0xff]
        %v1279 = vld [vmem:[%s6 + $0x238] sm:$0xff]
        %1281 = vset.pattern.permute.xlu0 0
        %1282 = vperm.xlu0 %1281, %v1248
        %v1283 = vpop.permute.xlu0 %1282
        %1286 = vset.pattern.permute.xlu0 0
        %1287 = vperm.xlu0 %1286, %v1249
        %v1288 = vpop.permute.xlu0 %1287
        %1291 = vset.pattern.permute.xlu0 0
        %1292 = vperm.xlu0 %1291, %v1250
        %v1293 = vpop.permute.xlu0 %1292
        %1296 = vset.pattern.permute.xlu0 0
        %1297 = vperm.xlu0 %1296, %v1251
        %v1298 = vpop.permute.xlu0 %1297
        %1301 = vset.pattern.permute.xlu0 0
        %1302 = vperm.xlu0 %1301, %v1252
        %v1303 = vpop.permute.xlu0 %1302
        %1306 = vset.pattern.permute.xlu0 0
        %1307 = vperm.xlu0 %1306, %v1253
        %v1308 = vpop.permute.xlu0 %1307
        %1311 = vset.pattern.permute.xlu0 0
        %1312 = vperm.xlu0 %1311, %v1254
        %v1313 = vpop.permute.xlu0 %1312
        %1316 = vset.pattern.permute.xlu0 0
        %1317 = vperm.xlu0 %1316, %v1255
        %v1318 = vpop.permute.xlu0 %1317
        %1321 = vset.pattern.permute.xlu0 0
        %1322 = vperm.xlu0 %1321, %v1256
        %v1323 = vpop.permute.xlu0 %1322
        %1326 = vset.pattern.permute.xlu0 0
        %1327 = vperm.xlu0 %1326, %v1257
        %v1328 = vpop.permute.xlu0 %1327
        %1331 = vset.pattern.permute.xlu0 0
        %1332 = vperm.xlu0 %1331, %v1258
        %v1333 = vpop.permute.xlu0 %1332
        %1336 = vset.pattern.permute.xlu0 0
        %1337 = vperm.xlu0 %1336, %v1259
        %v1338 = vpop.permute.xlu0 %1337
        %1341 = vset.pattern.permute.xlu0 0
        %1342 = vperm.xlu0 %1341, %v1260
        %v1343 = vpop.permute.xlu0 %1342
        %1346 = vset.pattern.permute.xlu0 0
        %1347 = vperm.xlu0 %1346, %v1261
        %v1348 = vpop.permute.xlu0 %1347
        %1351 = vset.pattern.permute.xlu0 0
        %1352 = vperm.xlu0 %1351, %v1262
        %v1353 = vpop.permute.xlu0 %1352
        %1356 = vset.pattern.permute.xlu0 0
        %1357 = vperm.xlu0 %1356, %v1263
        %v1358 = vpop.permute.xlu0 %1357
        %1361 = vset.pattern.permute.xlu0 0
        %1362 = vperm.xlu0 %1361, %v1264
        %v1363 = vpop.permute.xlu0 %1362
        %1366 = vset.pattern.permute.xlu0 0
        %1367 = vperm.xlu0 %1366, %v1265
        %v1368 = vpop.permute.xlu0 %1367
        %1371 = vset.pattern.permute.xlu0 0
        %1372 = vperm.xlu0 %1371, %v1266
        %v1373 = vpop.permute.xlu0 %1372
        %1376 = vset.pattern.permute.xlu0 0
        %1377 = vperm.xlu0 %1376, %v1267
        %v1378 = vpop.permute.xlu0 %1377
        %1381 = vset.pattern.permute.xlu0 0
        %1382 = vperm.xlu0 %1381, %v1268
        %v1383 = vpop.permute.xlu0 %1382
        %1386 = vset.pattern.permute.xlu0 0
        %1387 = vperm.xlu0 %1386, %v1269
        %v1388 = vpop.permute.xlu0 %1387
        %1391 = vset.pattern.permute.xlu0 0
        %1392 = vperm.xlu0 %1391, %v1270
        %v1393 = vpop.permute.xlu0 %1392
        %1396 = vset.pattern.permute.xlu0 0
        %1397 = vperm.xlu0 %1396, %v1271
        %v1398 = vpop.permute.xlu0 %1397
        %1401 = vset.pattern.permute.xlu0 0
        %1402 = vperm.xlu0 %1401, %v1272
        %v1403 = vpop.permute.xlu0 %1402
        %1406 = vset.pattern.permute.xlu0 0
        %1407 = vperm.xlu0 %1406, %v1273
        %v1408 = vpop.permute.xlu0 %1407
        %1411 = vset.pattern.permute.xlu0 0
        %1412 = vperm.xlu0 %1411, %v1274
        %v1413 = vpop.permute.xlu0 %1412
        %1416 = vset.pattern.permute.xlu0 0
        %1417 = vperm.xlu0 %1416, %v1275
        %v1418 = vpop.permute.xlu0 %1417
        %1421 = vset.pattern.permute.xlu0 0
        %1422 = vperm.xlu0 %1421, %v1276
        %v1423 = vpop.permute.xlu0 %1422
        %1426 = vset.pattern.permute.xlu0 0
        %1427 = vperm.xlu0 %1426, %v1277
        %v1428 = vpop.permute.xlu0 %1427
        %1431 = vset.pattern.permute.xlu0 0
        %1432 = vperm.xlu0 %1431, %v1278
        %v1433 = vpop.permute.xlu0 %1432
        %1436 = vset.pattern.permute.xlu0 0
        %1437 = vperm.xlu0 %1436, %v1279
        %v1438 = vpop.permute.xlu0 %1437
        %v1472 = vunpack.c.l.b16 %v1216
        %v1473 = vunpack.c.l.b16 %v1217
        %v1474 = vunpack.c.l.b16 %v1218
        %v1475 = vunpack.c.l.b16 %v1219
        %v1476 = vunpack.c.l.b16 %v1220
        %v1477 = vunpack.c.l.b16 %v1221
        %v1478 = vunpack.c.l.b16 %v1222
        %v1479 = vunpack.c.l.b16 %v1223
        %v1480 = vunpack.c.l.b16 %v1224
        %v1481 = vunpack.c.l.b16 %v1225
        %v1482 = vunpack.c.l.b16 %v1226
        %v1483 = vunpack.c.l.b16 %v1227
        %v1484 = vunpack.c.l.b16 %v1228
        %v1485 = vunpack.c.l.b16 %v1229
        %v1486 = vunpack.c.l.b16 %v1230
        %v1487 = vunpack.c.l.b16 %v1231
        %v1488 = vunpack.c.l.b16 %v1232
        %v1489 = vunpack.c.l.b16 %v1233
        %v1490 = vunpack.c.l.b16 %v1234
        %v1491 = vunpack.c.l.b16 %v1235
        %v1492 = vunpack.c.l.b16 %v1236
        %v1493 = vunpack.c.l.b16 %v1237
        %v1494 = vunpack.c.l.b16 %v1238
        %v1495 = vunpack.c.l.b16 %v1239
        %v1496 = vunpack.c.l.b16 %v1240
        %v1497 = vunpack.c.l.b16 %v1241
        %v1498 = vunpack.c.l.b16 %v1242
        %v1499 = vunpack.c.l.b16 %v1243
        %v1500 = vunpack.c.l.b16 %v1244
        %v1501 = vunpack.c.l.b16 %v1245
        %v1502 = vunpack.c.l.b16 %v1246
        %v1503 = vunpack.c.l.b16 %v1247
        %v1504 = vpack.c.b16 %v1473, %v1472
        %v1505 = vpack.c.b16 %v1475, %v1474
        %v1506 = vpack.c.b16 %v1477, %v1476
        %v1507 = vpack.c.b16 %v1479, %v1478
        %v1508 = vpack.c.b16 %v1481, %v1480
        %v1509 = vpack.c.b16 %v1483, %v1482
        %v1510 = vpack.c.b16 %v1485, %v1484
        %v1511 = vpack.c.b16 %v1487, %v1486
        %v1512 = vpack.c.b16 %v1489, %v1488
        %v1513 = vpack.c.b16 %v1491, %v1490
        %v1514 = vpack.c.b16 %v1493, %v1492
        %v1515 = vpack.c.b16 %v1495, %v1494
        %v1516 = vpack.c.b16 %v1497, %v1496
        %v1517 = vpack.c.b16 %v1499, %v1498
        %v1518 = vpack.c.b16 %v1501, %v1500
        %v1519 = vpack.c.b16 %v1503, %v1502
        %1536 = vmatprep.subr.bf16.mxu0 %v1215
        %1537 = vmatpush1.bf16.msra.mxu0 %v1214
        %1538 = vmatprep.subr.bf16.mxu0 %v1213
        %1539 = vmatpush1.bf16.msra.mxu0 %v1212
        %1540 = vmatprep.subr.bf16.mxu0 %v1211
        %1541 = vmatpush1.bf16.msra.mxu0 %v1210
        %1542 = vmatprep.subr.bf16.mxu0 %v1209
        %1543 = vmatpush1.bf16.msra.mxu0 %v1208
        %1544 = vmatprep.subr.bf16.mxu0 %v1207
        %1545 = vmatpush1.bf16.msra.mxu0 %v1206
        %1546 = vmatprep.subr.bf16.mxu0 %v1205
        %1547 = vmatpush1.bf16.msra.mxu0 %v1204
        %1548 = vmatprep.subr.bf16.mxu0 %v1203
        %1549 = vmatpush1.bf16.msra.mxu0 %v1202
        %1550 = vmatprep.subr.bf16.mxu0 %v1201
        %1551 = vmatpush1.bf16.msra.mxu0 %v1200
        %1552 = vmatprep.subr.bf16.mxu0 0
        %1553 = vmatpush2.bf16.msra.mxu0 0
        %1554 = vmatprep.subr.bf16.mxu0 0
        %1555 = vmatpush2.bf16.msra.mxu0 0
        %1556 = vmatprep.subr.bf16.mxu0 0
        %1557 = vmatpush2.bf16.msra.mxu0 0
        %1558 = vmatprep.subr.bf16.mxu0 0
        %1559 = vmatpush2.bf16.msra.mxu0 0
        %1560 = vmatprep.subr.bf16.mxu0 0
        %1561 = vmatpush2.bf16.msra.mxu0 0
        %1562 = vmatprep.subr.bf16.mxu0 0
        %1563 = vmatpush2.bf16.msra.mxu0 0
        %1564 = vmatprep.subr.bf16.mxu0 0
        %1565 = vmatpush2.bf16.msra.mxu0 0
        %1566 = vmatprep.subr.bf16.mxu0 0
        %1567 = vmatpush2.bf16.msra.mxu0 0
        %1568 = vmatprep.mubr.bf16.mxu0 0
        %1569 = vmatmul.mubr.bf16.gmra.mxu0 %v1504
        %v1570 = vpop.f32.mrf.mxu0
        %v1571 = vadd.f32 %v1283, %v1570
        %v1572 = vpop.f32.mrf.mxu0
        %v1573 = vadd.f32 %v1283, %v1572
        %v1574 = vpop.f32.mrf.mxu0
        %v1575 = vadd.f32 %v1288, %v1574
        %v1576 = vpop.f32.mrf.mxu0
        %v1577 = vadd.f32 %v1288, %v1576
        %1578 = vmatprep.mubr.bf16.mxu0 0
        %1579 = vmatmul.mubr.bf16.gmra.mxu0 %v1505
        %v1580 = vpop.f32.mrf.mxu0
        %v1581 = vadd.f32 %v1293, %v1580
        %v1582 = vpop.f32.mrf.mxu0
        %v1583 = vadd.f32 %v1293, %v1582
        %v1584 = vpop.f32.mrf.mxu0
        %v1585 = vadd.f32 %v1298, %v1584
        %v1586 = vpop.f32.mrf.mxu0
        %v1587 = vadd.f32 %v1298, %v1586
        %1588 = vmatprep.mubr.bf16.mxu0 0
        %1589 = vmatmul.mubr.bf16.gmra.mxu0 %v1506
        %v1590 = vpop.f32.mrf.mxu0
        %v1591 = vadd.f32 %v1303, %v1590
        %v1592 = vpop.f32.mrf.mxu0
        %v1593 = vadd.f32 %v1303, %v1592
        %v1594 = vpop.f32.mrf.mxu0
        %v1595 = vadd.f32 %v1308, %v1594
        %v1596 = vpop.f32.mrf.mxu0
        %v1597 = vadd.f32 %v1308, %v1596
        %1598 = vmatprep.mubr.bf16.mxu0 0
        %1599 = vmatmul.mubr.bf16.gmra.mxu0 %v1507
        %v1600 = vpop.f32.mrf.mxu0
        %v1601 = vadd.f32 %v1313, %v1600
        %v1602 = vpop.f32.mrf.mxu0
        %v1603 = vadd.f32 %v1313, %v1602
        %v1604 = vpop.f32.mrf.mxu0
        %v1605 = vadd.f32 %v1318, %v1604
        %v1606 = vpop.f32.mrf.mxu0
        %v1607 = vadd.f32 %v1318, %v1606
        %1608 = vmatprep.mubr.bf16.mxu0 0
        %1609 = vmatmul.mubr.bf16.gmra.mxu0 %v1508
        %v1610 = vpop.f32.mrf.mxu0
        %v1611 = vadd.f32 %v1323, %v1610
        %v1612 = vpop.f32.mrf.mxu0
        %v1613 = vadd.f32 %v1323, %v1612
        %v1614 = vpop.f32.mrf.mxu0
        %v1615 = vadd.f32 %v1328, %v1614
        %v1616 = vpop.f32.mrf.mxu0
        %v1617 = vadd.f32 %v1328, %v1616
        %1618 = vmatprep.mubr.bf16.mxu0 0
        %1619 = vmatmul.mubr.bf16.gmra.mxu0 %v1509
        %v1620 = vpop.f32.mrf.mxu0
        %v1621 = vadd.f32 %v1333, %v1620
        %v1622 = vpop.f32.mrf.mxu0
        %v1623 = vadd.f32 %v1333, %v1622
        %v1624 = vpop.f32.mrf.mxu0
        %v1625 = vadd.f32 %v1338, %v1624
        %v1626 = vpop.f32.mrf.mxu0
        %v1627 = vadd.f32 %v1338, %v1626
        %1628 = vmatprep.mubr.bf16.mxu0 0
        %1629 = vmatmul.mubr.bf16.gmra.mxu0 %v1510
        %v1630 = vpop.f32.mrf.mxu0
        %v1631 = vadd.f32 %v1343, %v1630
        %v1632 = vpop.f32.mrf.mxu0
        %v1633 = vadd.f32 %v1343, %v1632
        %v1634 = vpop.f32.mrf.mxu0
        %v1635 = vadd.f32 %v1348, %v1634
        %v1636 = vpop.f32.mrf.mxu0
        %v1637 = vadd.f32 %v1348, %v1636
        %1638 = vmatprep.mubr.bf16.mxu0 0
        %1639 = vmatmul.mubr.bf16.gmra.mxu0 %v1511
        %v1640 = vpop.f32.mrf.mxu0
        %v1641 = vadd.f32 %v1353, %v1640
        %v1642 = vpop.f32.mrf.mxu0
        %v1643 = vadd.f32 %v1353, %v1642
        %v1644 = vpop.f32.mrf.mxu0
        %v1645 = vadd.f32 %v1358, %v1644
        %v1646 = vpop.f32.mrf.mxu0
        %v1647 = vadd.f32 %v1358, %v1646
        %1648 = vmatprep.mubr.bf16.mxu0 0
        %1649 = vmatmul.mubr.bf16.gmra.mxu0 %v1512
        %v1650 = vpop.f32.mrf.mxu0
        %v1651 = vadd.f32 %v1363, %v1650
        %v1652 = vpop.f32.mrf.mxu0
        %v1653 = vadd.f32 %v1363, %v1652
        %v1654 = vpop.f32.mrf.mxu0
        %v1655 = vadd.f32 %v1368, %v1654
        %v1656 = vpop.f32.mrf.mxu0
        %v1657 = vadd.f32 %v1368, %v1656
        %1658 = vmatprep.mubr.bf16.mxu0 0
        %1659 = vmatmul.mubr.bf16.gmra.mxu0 %v1513
        %v1660 = vpop.f32.mrf.mxu0
        %v1661 = vadd.f32 %v1373, %v1660
        %v1662 = vpop.f32.mrf.mxu0
        %v1663 = vadd.f32 %v1373, %v1662
        %v1664 = vpop.f32.mrf.mxu0
        %v1665 = vadd.f32 %v1378, %v1664
        %v1666 = vpop.f32.mrf.mxu0
        %v1667 = vadd.f32 %v1378, %v1666
        %1668 = vmatprep.mubr.bf16.mxu0 0
        %1669 = vmatmul.mubr.bf16.gmra.mxu0 %v1514
        %v1670 = vpop.f32.mrf.mxu0
        %v1671 = vadd.f32 %v1383, %v1670
        %v1672 = vpop.f32.mrf.mxu0
        %v1673 = vadd.f32 %v1383, %v1672
        %v1674 = vpop.f32.mrf.mxu0
        %v1675 = vadd.f32 %v1388, %v1674
        %v1676 = vpop.f32.mrf.mxu0
        %v1677 = vadd.f32 %v1388, %v1676
        %1678 = vmatprep.mubr.bf16.mxu0 0
        %1679 = vmatmul.mubr.bf16.gmra.mxu0 %v1515
        %v1680 = vpop.f32.mrf.mxu0
        %v1681 = vadd.f32 %v1393, %v1680
        %v1682 = vpop.f32.mrf.mxu0
        %v1683 = vadd.f32 %v1393, %v1682
        %v1684 = vpop.f32.mrf.mxu0
        %v1685 = vadd.f32 %v1398, %v1684
        %v1686 = vpop.f32.mrf.mxu0
        %v1687 = vadd.f32 %v1398, %v1686
        %1688 = vmatprep.mubr.bf16.mxu0 0
        %1689 = vmatmul.mubr.bf16.gmra.mxu0 %v1516
        %v1690 = vpop.f32.mrf.mxu0
        %v1691 = vadd.f32 %v1403, %v1690
        %v1692 = vpop.f32.mrf.mxu0
        %v1693 = vadd.f32 %v1403, %v1692
        %v1694 = vpop.f32.mrf.mxu0
        %v1695 = vadd.f32 %v1408, %v1694
        %v1696 = vpop.f32.mrf.mxu0
        %v1697 = vadd.f32 %v1408, %v1696
        %1698 = vmatprep.mubr.bf16.mxu0 0
        %1699 = vmatmul.mubr.bf16.gmra.mxu0 %v1517
        %v1700 = vpop.f32.mrf.mxu0
        %v1701 = vadd.f32 %v1413, %v1700
        %v1702 = vpop.f32.mrf.mxu0
        %v1703 = vadd.f32 %v1413, %v1702
        %v1704 = vpop.f32.mrf.mxu0
        %v1705 = vadd.f32 %v1418, %v1704
        %v1706 = vpop.f32.mrf.mxu0
        %v1707 = vadd.f32 %v1418, %v1706
        %1708 = vmatprep.mubr.bf16.mxu0 0
        %1709 = vmatmul.mubr.bf16.gmra.mxu0 %v1518
        %v1710 = vpop.f32.mrf.mxu0
        %v1711 = vadd.f32 %v1423, %v1710
        %v1712 = vpop.f32.mrf.mxu0
        %v1713 = vadd.f32 %v1423, %v1712
        %v1714 = vpop.f32.mrf.mxu0
        %v1715 = vadd.f32 %v1428, %v1714
        %v1716 = vpop.f32.mrf.mxu0
        %v1717 = vadd.f32 %v1428, %v1716
        %1718 = vmatprep.mubr.bf16.mxu0 0
        %1719 = vmatmul.mubr.bf16.gmra.mxu0 %v1519
        %v1720 = vpop.f32.mrf.mxu0
        %v1721 = vadd.f32 %v1433, %v1720
        %v1722 = vpop.f32.mrf.mxu0
        %v1723 = vadd.f32 %v1433, %v1722
        %v1724 = vpop.f32.mrf.mxu0
        %v1725 = vadd.f32 %v1438, %v1724
        %v1726 = vpop.f32.mrf.mxu0
        %v1727 = vadd.f32 %v1438, %v1726
        %1728 = vdwg.mxu0
        %v1729 = vmax.f32 %v1571, 0.0
        %v1730 = vmax.f32 %v1573, 0.0
        %v1731 = vmax.f32 %v1575, 0.0
        %v1732 = vmax.f32 %v1577, 0.0
        %v1733 = vmax.f32 %v1581, 0.0
        %v1734 = vmax.f32 %v1583, 0.0
        %v1735 = vmax.f32 %v1585, 0.0
        %v1736 = vmax.f32 %v1587, 0.0
        %v1737 = vmax.f32 %v1591, 0.0
        %v1738 = vmax.f32 %v1593, 0.0
        %v1739 = vmax.f32 %v1595, 0.0
        %v1740 = vmax.f32 %v1597, 0.0
        %v1741 = vmax.f32 %v1601, 0.0
        %v1742 = vmax.f32 %v1603, 0.0
        %v1743 = vmax.f32 %v1605, 0.0
        %v1744 = vmax.f32 %v1607, 0.0
        %v1745 = vmax.f32 %v1611, 0.0
        %v1746 = vmax.f32 %v1613, 0.0
        %v1747 = vmax.f32 %v1615, 0.0
        %v1748 = vmax.f32 %v1617, 0.0
        %v1749 = vmax.f32 %v1621, 0.0
        %v1750 = vmax.f32 %v1623, 0.0
        %v1751 = vmax.f32 %v1625, 0.0
        %v1752 = vmax.f32 %v1627, 0.0
        %v1753 = vmax.f32 %v1631, 0.0
        %v1754 = vmax.f32 %v1633, 0.0
        %v1755 = vmax.f32 %v1635, 0.0
        %v1756 = vmax.f32 %v1637, 0.0
        %v1757 = vmax.f32 %v1641, 0.0
        %v1758 = vmax.f32 %v1643, 0.0
        %v1759 = vmax.f32 %v1645, 0.0
        %v1760 = vmax.f32 %v1647, 0.0
        %v1761 = vmax.f32 %v1651, 0.0
        %v1762 = vmax.f32 %v1653, 0.0
        %v1763 = vmax.f32 %v1655, 0.0
        %v1764 = vmax.f32 %v1657, 0.0
        %v1765 = vmax.f32 %v1661, 0.0
        %v1766 = vmax.f32 %v1663, 0.0
        %v1767 = vmax.f32 %v1665, 0.0
        %v1768 = vmax.f32 %v1667, 0.0
        %v1769 = vmax.f32 %v1671, 0.0
        %v1770 = vmax.f32 %v1673, 0.0
        %v1771 = vmax.f32 %v1675, 0.0
        %v1772 = vmax.f32 %v1677, 0.0
        %v1773 = vmax.f32 %v1681, 0.0
        %v1774 = vmax.f32 %v1683, 0.0
        %v1775 = vmax.f32 %v1685, 0.0
        %v1776 = vmax.f32 %v1687, 0.0
        %v1777 = vmax.f32 %v1691, 0.0
        %v1778 = vmax.f32 %v1693, 0.0
        %v1779 = vmax.f32 %v1695, 0.0
        %v1780 = vmax.f32 %v1697, 0.0
        %v1781 = vmax.f32 %v1701, 0.0
        %v1782 = vmax.f32 %v1703, 0.0
        %v1783 = vmax.f32 %v1705, 0.0
        %v1784 = vmax.f32 %v1707, 0.0
        %v1785 = vmax.f32 %v1711, 0.0
        %v1786 = vmax.f32 %v1713, 0.0
        %v1787 = vmax.f32 %v1715, 0.0
        %v1788 = vmax.f32 %v1717, 0.0
        %v1789 = vmax.f32 %v1721, 0.0
        %v1790 = vmax.f32 %v1723, 0.0
        %v1791 = vmax.f32 %v1725, 0.0
        %v1792 = vmax.f32 %v1727, 0.0
        %v1793 = vpack.c.bf16 %v1731, %v1729
        %v1794 = vpack.c.bf16 %v1732, %v1730
        %v1795 = vpack.c.bf16 %v1735, %v1733
        %v1796 = vpack.c.bf16 %v1736, %v1734
        %v1797 = vpack.c.bf16 %v1739, %v1737
        %v1798 = vpack.c.bf16 %v1740, %v1738
        %v1799 = vpack.c.bf16 %v1743, %v1741
        %v1800 = vpack.c.bf16 %v1744, %v1742
        %v1801 = vpack.c.bf16 %v1747, %v1745
        %v1802 = vpack.c.bf16 %v1748, %v1746
        %v1803 = vpack.c.bf16 %v1751, %v1749
        %v1804 = vpack.c.bf16 %v1752, %v1750
        %v1805 = vpack.c.bf16 %v1755, %v1753
        %v1806 = vpack.c.bf16 %v1756, %v1754
        %v1807 = vpack.c.bf16 %v1759, %v1757
        %v1808 = vpack.c.bf16 %v1760, %v1758
        %v1809 = vpack.c.bf16 %v1763, %v1761
        %v1810 = vpack.c.bf16 %v1764, %v1762
        %v1811 = vpack.c.bf16 %v1767, %v1765
        %v1812 = vpack.c.bf16 %v1768, %v1766
        %v1813 = vpack.c.bf16 %v1771, %v1769
        %v1814 = vpack.c.bf16 %v1772, %v1770
        %v1815 = vpack.c.bf16 %v1775, %v1773
        %v1816 = vpack.c.bf16 %v1776, %v1774
        %v1817 = vpack.c.bf16 %v1779, %v1777
        %v1818 = vpack.c.bf16 %v1780, %v1778
        %v1819 = vpack.c.bf16 %v1783, %v1781
        %v1820 = vpack.c.bf16 %v1784, %v1782
        %v1821 = vpack.c.bf16 %v1787, %v1785
        %v1822 = vpack.c.bf16 %v1788, %v1786
        %v1823 = vpack.c.bf16 %v1791, %v1789
        %v1824 = vpack.c.bf16 %v1792, %v1790
        %v1857 = vunpack.c.l.b16 %v1793
        %v1858 = vunpack.c.l.b16 %v1794
        %v1859 = vunpack.c.h.b16 %v1793
        %v1860 = vunpack.c.h.b16 %v1794
        %v1861 = vunpack.c.l.b16 %v1795
        %v1862 = vunpack.c.l.b16 %v1796
        %v1863 = vunpack.c.h.b16 %v1795
        %v1864 = vunpack.c.h.b16 %v1796
        %v1865 = vunpack.c.l.b16 %v1797
        %v1866 = vunpack.c.l.b16 %v1798
        %v1867 = vunpack.c.h.b16 %v1797
        %v1868 = vunpack.c.h.b16 %v1798
        %v1869 = vunpack.c.l.b16 %v1799
        %v1870 = vunpack.c.l.b16 %v1800
        %v1871 = vunpack.c.h.b16 %v1799
        %v1872 = vunpack.c.h.b16 %v1800
        %v1873 = vunpack.c.l.b16 %v1801
        %v1874 = vunpack.c.l.b16 %v1802
        %v1875 = vunpack.c.h.b16 %v1801
        %v1876 = vunpack.c.h.b16 %v1802
        %v1877 = vunpack.c.l.b16 %v1803
        %v1878 = vunpack.c.l.b16 %v1804
        %v1879 = vunpack.c.h.b16 %v1803
        %v1880 = vunpack.c.h.b16 %v1804
        %v1881 = vunpack.c.l.b16 %v1805
        %v1882 = vunpack.c.l.b16 %v1806
        %v1883 = vunpack.c.h.b16 %v1805
        %v1884 = vunpack.c.h.b16 %v1806
        %v1885 = vunpack.c.l.b16 %v1807
        %v1886 = vunpack.c.l.b16 %v1808
        %v1887 = vunpack.c.h.b16 %v1807
        %v1888 = vunpack.c.h.b16 %v1808
        %v1889 = vunpack.c.l.b16 %v1809
        %v1890 = vunpack.c.l.b16 %v1810
        %v1891 = vunpack.c.h.b16 %v1809
        %v1892 = vunpack.c.h.b16 %v1810
        %v1893 = vunpack.c.l.b16 %v1811
        %v1894 = vunpack.c.l.b16 %v1812
        %v1895 = vunpack.c.h.b16 %v1811
        %v1896 = vunpack.c.h.b16 %v1812
        %v1897 = vunpack.c.l.b16 %v1813
        %v1898 = vunpack.c.l.b16 %v1814
        %v1899 = vunpack.c.h.b16 %v1813
        %v1900 = vunpack.c.h.b16 %v1814
        %v1901 = vunpack.c.l.b16 %v1815
        %v1902 = vunpack.c.l.b16 %v1816
        %v1903 = vunpack.c.h.b16 %v1815
        %v1904 = vunpack.c.h.b16 %v1816
        %v1905 = vunpack.c.l.b16 %v1817
        %v1906 = vunpack.c.l.b16 %v1818
        %v1907 = vunpack.c.h.b16 %v1817
        %v1908 = vunpack.c.h.b16 %v1818
        %v1909 = vunpack.c.l.b16 %v1819
        %v1910 = vunpack.c.l.b16 %v1820
        %v1911 = vunpack.c.h.b16 %v1819
        %v1912 = vunpack.c.h.b16 %v1820
        %v1913 = vunpack.c.l.b16 %v1821
        %v1914 = vunpack.c.l.b16 %v1822
        %v1915 = vunpack.c.h.b16 %v1821
        %v1916 = vunpack.c.h.b16 %v1822
        %v1917 = vunpack.c.l.b16 %v1823
        %v1918 = vunpack.c.l.b16 %v1824
        %v1919 = vunpack.c.h.b16 %v1823
        %v1920 = vunpack.c.h.b16 %v1824
        %v1921 = vpack.c.b16 %v1858, %v1857
        %v1922 = vpack.c.b16 %v1860, %v1859
        %v1923 = vpack.c.b16 %v1862, %v1861
        %v1924 = vpack.c.b16 %v1864, %v1863
        %v1925 = vpack.c.b16 %v1866, %v1865
        %v1926 = vpack.c.b16 %v1868, %v1867
        %v1927 = vpack.c.b16 %v1870, %v1869
        %v1928 = vpack.c.b16 %v1872, %v1871
        %v1929 = vpack.c.b16 %v1874, %v1873
        %v1930 = vpack.c.b16 %v1876, %v1875
        %v1931 = vpack.c.b16 %v1878, %v1877
        %v1932 = vpack.c.b16 %v1880, %v1879
        %v1933 = vpack.c.b16 %v1882, %v1881
        %v1934 = vpack.c.b16 %v1884, %v1883
        %v1935 = vpack.c.b16 %v1886, %v1885
        %v1936 = vpack.c.b16 %v1888, %v1887
        %v1937 = vpack.c.b16 %v1890, %v1889
        %v1938 = vpack.c.b16 %v1892, %v1891
        %v1939 = vpack.c.b16 %v1894, %v1893
        %v1940 = vpack.c.b16 %v1896, %v1895
        %v1941 = vpack.c.b16 %v1898, %v1897
        %v1942 = vpack.c.b16 %v1900, %v1899
        %v1943 = vpack.c.b16 %v1902, %v1901
        %v1944 = vpack.c.b16 %v1904, %v1903
        %v1945 = vpack.c.b16 %v1906, %v1905
        %v1946 = vpack.c.b16 %v1908, %v1907
        %v1947 = vpack.c.b16 %v1910, %v1909
        %v1948 = vpack.c.b16 %v1912, %v1911
        %v1949 = vpack.c.b16 %v1914, %v1913
        %v1950 = vpack.c.b16 %v1916, %v1915
        %v1951 = vpack.c.b16 %v1918, %v1917
        %v1952 = vpack.c.b16 %v1920, %v1919
        %1985 = vst [vmem:[%s296] sm:$0xff] %v1921
        %1986 = vst [vmem:[%s296 + $0x8] sm:$0xff] %v1922
        %1987 = vst [vmem:[%s296 + $0x10] sm:$0xff] %v1923
        %1988 = vst [vmem:[%s296 + $0x18] sm:$0xff] %v1924
        %1989 = vst [vmem:[%s296 + $0x20] sm:$0xff] %v1925
        %1990 = vst [vmem:[%s296 + $0x28] sm:$0xff] %v1926
        %1991 = vst [vmem:[%s296 + $0x30] sm:$0xff] %v1927
        %1992 = vst [vmem:[%s296 + $0x38] sm:$0xff] %v1928
        %1993 = vst [vmem:[%s296 + $0x40] sm:$0xff] %v1929
        %1994 = vst [vmem:[%s296 + $0x48] sm:$0xff] %v1930
        %1995 = vst [vmem:[%s296 + $0x50] sm:$0xff] %v1931
        %1996 = vst [vmem:[%s296 + $0x58] sm:$0xff] %v1932
        %1997 = vst [vmem:[%s296 + $0x60] sm:$0xff] %v1933
        %1998 = vst [vmem:[%s296 + $0x68] sm:$0xff] %v1934
        %1999 = vst [vmem:[%s296 + $0x70] sm:$0xff] %v1935
        %2000 = vst [vmem:[%s296 + $0x78] sm:$0xff] %v1936
        %2001 = vst [vmem:[%s296 + $0x80] sm:$0xff] %v1937
        %2002 = vst [vmem:[%s296 + $0x88] sm:$0xff] %v1938
        %2003 = vst [vmem:[%s296 + $0x90] sm:$0xff] %v1939
        %2004 = vst [vmem:[%s296 + $0x98] sm:$0xff] %v1940
        %2005 = vst [vmem:[%s296 + $0xa0] sm:$0xff] %v1941
        %2006 = vst [vmem:[%s296 + $0xa8] sm:$0xff] %v1942
        %2007 = vst [vmem:[%s296 + $0xb0] sm:$0xff] %v1943
        %2008 = vst [vmem:[%s296 + $0xb8] sm:$0xff] %v1944
        %2009 = vst [vmem:[%s296 + $0xc0] sm:$0xff] %v1945
        %2010 = vst [vmem:[%s296 + $0xc8] sm:$0xff] %v1946
        %2011 = vst [vmem:[%s296 + $0xd0] sm:$0xff] %v1947
        %2012 = vst [vmem:[%s296 + $0xd8] sm:$0xff] %v1948
        %2013 = vst [vmem:[%s296 + $0xe0] sm:$0xff] %v1949
        %2014 = vst [vmem:[%s296 + $0xe8] sm:$0xff] %v1950
        %2015 = vst [vmem:[%s296 + $0xf0] sm:$0xff] %v1951
        %2016 = vst [vmem:[%s296 + $0xf8] sm:$0xff] %v1952
        %s2017 = sand.u32 %s197, 1
        %s2018 = scalar_lea.sflag [#allocation3], %s2017
        %s2019 = sand.u32 %s197, 1
        %s2020 = smul.addr %s2019, 256
        %s2021 = scalar_lea.vmem [#allocation2], %s2020
        // Predicated region
        $region49: #{tpu_custom_call.1} parent=47 // pred_check
          %p2022 = pneg %p207
        $region50: #{tpu_custom_call.1} parent=47 // pred_check_branch
          %2024 = sbr.rel (%p2022) target = $region52
        $region51: #{tpu_custom_call.1} parent=47 // pred_region
          %s2025 = smul.u32 2, %s26
          %s2027 = ssub.s32 4096, 4096
          %2028 = vsyncadd %s2018, %s2027
          %s2029 = smul.addr %s25, 64
          %s2030 = sadd.s32 %s2025, %s2029
          %s2031 = smul.addr %s2030, 64
          %s2032 = scalar_lea.hbm %s7, %s2031
          %s2033 = sshll.u32 %s2021, 4
          %s2034 = int_to_ptr.vmem [resolvable:$true] %s2033
          %2039 = dma.vmem_to_hbm [thread:$0]  %s2034, 4096, %s2032, %s2018, 128, 128, 8
        $region52: #{tpu_custom_call.1} parent=47 // pred_fallthru
          _
      $region48: #{tpu_custom_call.1} parent=5 // pred_fallthru
        _
      %p2040 = scmp.le.s32.totalorder 2, %s16
      // Predicated region
      $region53: #{tpu_custom_call.1} parent=5 // pred_check
        %p2041 = pneg %p2040
      $region54: #{tpu_custom_call.1} parent=5 // pred_check_branch
        %2043 = sbr.rel (%p2041) target = $region56
      $region55: #{tpu_custom_call.1} parent=5 // pred_region
        %s2044 = ssub.s32 %s16, 2
        // Predicated region
        $region57: #{tpu_custom_call.1} parent=55 // pred_check
          %p2045 = pneg %p213
        $region58: #{tpu_custom_call.1} parent=55 // pred_check_branch
          %2047 = sbr.rel (%p2045) target = $region60
        $region59: #{tpu_custom_call.1} parent=55 // pred_region
          %s2048 = sand.u32 %s198, 1
          %s2049 = scalar_lea.sflag [#allocation3], %s2048
          %s2050 = sand.u32 %s198, 1
          %s2051 = smul.addr %s2050, 256
          %s2052 = scalar_lea.vmem [#allocation2], %s2051
          %2053 = dma.done %s2049, 4096
        $region60: #{tpu_custom_call.1} parent=55 // pred_fallthru
          _
      $region56: #{tpu_custom_call.1} parent=5 // pred_fallthru
        _
    $region6: #{tpu_custom_call.1} parent=1 // loop_footer
      %s20 = sadd.s32 1, %s16
    $region7: #{tpu_custom_call.1} parent=1 // loop_footer_branch
      %15 = sbr.rel target = $region3
    $region8: #{tpu_custom_call.1} parent=1 // loop_exit
      _
    %2054 = vsyncpa [#allocation3], 1
    %s2055 = scalar_lea.sflag [#allocation3], 1
    %2056 = vsyncpa %s2055, 1

</llo_original>
